<compile_context>
chip_gen: v5e
topology: v5e:2x2
jax: 0.10.0
libtpu: 0.0.40
codegen_flags: <defaults>
</compile_context>

<pallas_src>
import math

import jax
import jax.numpy as jnp
from jax.experimental import pallas as pl
from jax.experimental.pallas import tpu as pltpu

# ----------------------------- config (small, synthetic) -----------------------------
BATCH = 2
SEQ = 8
HIDDEN = 32            # stands in for 768 of bert-base-uncased
NUM_HEADS = 4
HEAD_DIM = HIDDEN // NUM_HEADS
INTERMEDIATE = 64      # stands in for 3072
NUM_LAYERS = 2         # stands in for 12
VOCAB = 64
MAX_POS = 16
TYPE_VOCAB = 2
NUM_LABELS = 4
PAD_LABELS = 128       # lane-dense classifier output width
LN_EPS = 1e-12
TOKENS = BATCH * SEQ


# ----------------------------------- Pallas kernel -----------------------------------
def _bert_fused_kernel(emb_ref, bias_ref, hmask_ref, clssel_ref, eg_ref, ebeta_ref,
                       wqkv_ref, bqkv_ref, wo_ref, bo_ref, ln1g_ref, ln1b_ref,
                       wi_ref, bi_ref, wo2_ref, bo2_ref, ln2g_ref, ln2b_ref,
                       poolw_ref, poolb_ref, outw_ref, outb_ref,
                       o_ref):
    scale = 1.0 / math.sqrt(HEAD_DIM)

    def layernorm(x, g, b):
        mu = jnp.mean(x, axis=-1, keepdims=True)
        var = jnp.mean((x - mu) ** 2, axis=-1, keepdims=True)
        return (x - mu) * jax.lax.rsqrt(var + LN_EPS) * g + b

    def proj(x, w_bf16, b_f32):
        # bf16 operands on the MXU (no f32 pre-upcast of the weight), f32 accumulation.
        return jnp.dot(x.astype(jnp.bfloat16), w_bf16,
                       preferred_element_type=jnp.float32) + b_f32

    # --- embedding LayerNorm (no residual, no zeros tensor) ---
    x = layernorm(emb_ref[...], eg_ref[...], ebeta_ref[...])            # (T, H) f32
    bias = bias_ref[...]                                                 # (T, T) f32

    for l in range(NUM_LAYERS):
        # --- self-attention: fused QKV projection (single (H, 3H) matmul) ---
        qkv = proj(x, wqkv_ref[l], bqkv_ref[l])                          # (T, 3H)
        q = qkv[:, 0 * HIDDEN:1 * HIDDEN]
        k = qkv[:, 1 * HIDDEN:2 * HIDDEN]
        v = qkv[:, 2 * HIDDEN:3 * HIDDEN]

        # All batches/tokens at once per head; block-diagonal bias enforces batch separation
        # and key-padding; per-head feature masks avoid any head-dim slicing/transposes.
        ctx = jnp.zeros((TOKENS, HIDDEN), jnp.float32)
        for h in range(NUM_HEADS):
            hm = hmask_ref[h]                                            # (1, H) {0,1}
            s = jax.lax.dot_general(q * hm, k, (((1,), (1,)), ((), ())),
                                    preferred_element_type=jnp.float32)  # (T, T)
            s = s * scale + bias
            s = s - jnp.max(s, axis=-1, keepdims=True)
            p = jnp.exp(s)
            p = p / jnp.sum(p, axis=-1, keepdims=True)
            ctx = ctx + jnp.dot(p, v * hm, preferred_element_type=jnp.float32)

        # --- attention output projection + residual + LayerNorm (fused) ---
        x = layernorm(proj(ctx, wo_ref[l], bo_ref[l]) + x, ln1g_ref[l], ln1b_ref[l])

        # --- FFN (GELU) + residual + LayerNorm (fused) ---
        hdd = proj(x, wi_ref[l], bi_ref[l])
        # TODO(synk): HF BERT uses exact erf-GELU; tanh approximation kept for Mosaic-safe lowering.
        hdd = 0.5 * hdd * (1.0 + jnp.tanh(
            0.7978845608028654 * (hdd + 0.044715 * hdd * hdd * hdd)))
        x = layernorm(proj(hdd, wo2_ref[l], bo2_ref[l]) + x, ln2g_ref[l], ln2b_ref[l])

    # --- pooler: gather [CLS] rows via a tiny selection matmul, then tanh(W @ cls) ---
    cls = jnp.dot(clssel_ref[...], x, preferred_element_type=jnp.float32)     # (B, H)
    pooled = jnp.tanh(proj(cls, poolw_ref[...], poolb_ref[...]))

    # --- bert_drop (eval: identity) + Linear + softmax over dim=1 ---
    # TODO(synk): nn.Dropout(p=0.3) is identity at inference; no RNG dropout applied.
    # Lane-dense (128-wide) logits: padded columns carry a -1e9 bias -> exactly 0 probability.
    logits = proj(pooled, outw_ref[...], outb_ref[...])                       # (B, 128)
    logits = logits - jnp.max(logits, axis=-1, keepdims=True)
    e = jnp.exp(logits)
    o_ref[...] = (e / jnp.sum(e, axis=-1, keepdims=True)).astype(o_ref.dtype)


def _full_spec(shape):
    zeros = (0,) * len(shape)
    return pl.BlockSpec(tuple(shape), lambda i, _z=zeros: _z)


# ----------------------------------- params -----------------------------------
def init_params(key):
    def nrm(k, shape, dtype=jnp.float32):
        return (0.02 * jax.random.normal(k, shape, dtype=jnp.float32)).astype(dtype)

    keys = iter(jax.random.split(key, 16))
    L, H, I = NUM_LAYERS, HIDDEN, INTERMEDIATE

    out_w = nrm(next(keys), (H, NUM_LABELS))
    out_w_pad = jnp.zeros((H, PAD_LABELS), jnp.float32).at[:, :NUM_LABELS].set(out_w)
    out_b_pad = jnp.full((1, PAD_LABELS), -1e9, jnp.float32).at[:, :NUM_LABELS].set(0.0)

    return {
        # embeddings (tables stay f32; gathers are plain-JAX glue)
        "word_emb": nrm(next(keys), (VOCAB, H)),
        "pos_emb": nrm(next(keys), (MAX_POS, H)),
        "type_emb": nrm(next(keys), (TYPE_VOCAB, H)),
        "emb_ln_g": jnp.ones((1, H), jnp.float32),
        "emb_ln_b": jnp.zeros((1, H), jnp.float32),
        # encoder layers, stacked along a leading layer axis; matmul weights in bf16
        "wqkv": nrm(next(keys), (L, H, 3 * H), jnp.bfloat16),
        "bqkv": jnp.zeros((L, 1, 3 * H), jnp.float32),
        "wo": nrm(next(keys), (L, H, H), jnp.bfloat16),
        "bo": jnp.zeros((L, 1, H), jnp.float32),
        "ln1_g": jnp.ones((L, 1, H), jnp.float32),
        "ln1_b": jnp.zeros((L, 1, H), jnp.float32),
        "wi": nrm(next(keys), (L, H, I), jnp.bfloat16),
        "bi": jnp.zeros((L, 1, I), jnp.float32),
        "wo2": nrm(next(keys), (L, I, H), jnp.bfloat16),
        "bo2": jnp.zeros((L, 1, H), jnp.float32),
        "ln2_g": jnp.ones((L, 1, H), jnp.float32),
        "ln2_b": jnp.zeros((L, 1, H), jnp.float32),
        # pooler + classifier (classifier padded to 128 lane-dense label columns)
        "pool_w": nrm(next(keys), (H, H), jnp.bfloat16),
        "pool_b": jnp.zeros((1, H), jnp.float32),
        "out_w": out_w_pad.astype(jnp.bfloat16),
        "out_b": out_b_pad,
    }


# ----------------------------------- forward -----------------------------------
@jax.jit
def bert_base_uncased_forward(params, ids, mask, token_type_ids):
    # --- embeddings: gathers are plain-JAX glue; everything downstream is ONE Pallas kernel ---
    pos_ids = jnp.arange(SEQ, dtype=jnp.int32)[None, :]
    emb = (jnp.take(params["word_emb"], ids, axis=0)
           + jnp.take(params["pos_emb"], pos_ids, axis=0)
           + jnp.take(params["type_emb"], token_type_ids, axis=0))        # (B, S, H)
    emb = emb.reshape(TOKENS, HIDDEN).astype(jnp.float32)

    # Additive attention bias over the flattened token axis:
    #   cross-batch pairs -> -1e9 (block-diagonal), padded keys -> -10000 (HF-style).
    key_bias = ((1.0 - mask.astype(jnp.float32)) * -10000.0).reshape(TOKENS)     # (T,)
    batch_ids = jnp.repeat(jnp.arange(BATCH, dtype=jnp.int32), SEQ)              # (T,)
    same_batch = batch_ids[:, None] == batch_ids[None, :]                        # (T, T)
    attn_bias = jnp.where(same_batch, key_bias[None, :], jnp.float32(-1e9))      # (T, T)

    # Per-head feature masks (head h owns feature columns [h*Dh, (h+1)*Dh)).
    feat_head = jnp.arange(HIDDEN, dtype=jnp.int32) // HEAD_DIM                  # (H,)
    head_mask = (feat_head[None, :] == jnp.arange(NUM_HEADS, dtype=jnp.int32)[:, None])
    head_mask = head_mask.astype(jnp.float32)[:, None, :]                        # (Hh, 1, H)

    # [CLS]-row selection matrix (gather-as-matmul).
    cls_sel = jnp.zeros((BATCH, TOKENS), jnp.float32).at[
        jnp.arange(BATCH), jnp.arange(BATCH) * SEQ].set(1.0)                     # (B, T)

    inputs = (
        emb, attn_bias, head_mask, cls_sel, params["emb_ln_g"], params["emb_ln_b"],
        params["wqkv"], params["bqkv"], params["wo"], params["bo"],
        params["ln1_g"], params["ln1_b"],
        params["wi"], params["bi"], params["wo2"], params["bo2"],
        params["ln2_g"], params["ln2_b"],
        params["pool_w"], params["pool_b"], params["out_w"], params["out_b"],
    )

    probs_padded = pl.pallas_call(
        _bert_fused_kernel,
        out_shape=jax.ShapeDtypeStruct((BATCH, PAD_LABELS), jnp.float32),
        grid=(1,),
        in_specs=[_full_spec(a.shape) for a in inputs],
        out_specs=_full_spec((BATCH, PAD_LABELS)),
        compiler_params=pltpu.CompilerParams(dimension_semantics=("arbitrary",)),
    )(*inputs)

    return probs_padded[:, :NUM_LABELS]


# --------------------------------------- main ---------------------------------------
if __name__ == "__main__":
    key = jax.random.PRNGKey(0)
    k_param, k_ids, _ = jax.random.split(key, 3)

    params = init_params(k_param)
    ids = jax.random.randint(k_ids, (BATCH, SEQ), 0, VOCAB, dtype=jnp.int32)
    mask = jnp.ones((BATCH, SEQ), dtype=jnp.int32).at[1, SEQ - 2:].set(0)    # some padding
    token_type_ids = jnp.zeros((BATCH, SEQ), dtype=jnp.int32).at[:, SEQ // 2:].set(1)

    probs = bert_base_uncased_forward(params, ids, mask, token_type_ids)
    probs = jax.block_until_ready(probs)

    assert probs.shape == (BATCH, NUM_LABELS)
    assert bool(jnp.all(jnp.isfinite(probs)))
    assert bool(jnp.allclose(jnp.sum(probs, axis=1), 1.0, atol=1e-5))
    print("KERNEL_OK")
</pallas_src>

<mosaic_0001>
module attributes {stable_mosaic.version = 11 : i64} {
  func.func @_bert_fused_kernel(%arg0: i32, %arg1: memref<16x32xf32, #tpu.memory_space<vmem>>, %arg2: memref<16x16xf32, #tpu.memory_space<vmem>>, %arg3: memref<4x1x32xf32, #tpu.memory_space<vmem>>, %arg4: memref<2x16xf32, #tpu.memory_space<vmem>>, %arg5: memref<1x32xf32, #tpu.memory_space<vmem>>, %arg6: memref<1x32xf32, #tpu.memory_space<vmem>>, %arg7: memref<2x32x96xbf16, #tpu.memory_space<vmem>>, %arg8: memref<2x1x96xf32, #tpu.memory_space<vmem>>, %arg9: memref<2x32x32xbf16, #tpu.memory_space<vmem>>, %arg10: memref<2x1x32xf32, #tpu.memory_space<vmem>>, %arg11: memref<2x1x32xf32, #tpu.memory_space<vmem>>, %arg12: memref<2x1x32xf32, #tpu.memory_space<vmem>>, %arg13: memref<2x32x64xbf16, #tpu.memory_space<vmem>>, %arg14: memref<2x1x64xf32, #tpu.memory_space<vmem>>, %arg15: memref<2x64x32xbf16, #tpu.memory_space<vmem>>, %arg16: memref<2x1x32xf32, #tpu.memory_space<vmem>>, %arg17: memref<2x1x32xf32, #tpu.memory_space<vmem>>, %arg18: memref<2x1x32xf32, #tpu.memory_space<vmem>>, %arg19: memref<32x32xbf16, #tpu.memory_space<vmem>>, %arg20: memref<1x32xf32, #tpu.memory_space<vmem>>, %arg21: memref<32x128xbf16, #tpu.memory_space<vmem>>, %arg22: memref<1x128xf32, #tpu.memory_space<vmem>>, %arg23: memref<2x128xf32, #tpu.memory_space<vmem>>) attributes {dimension_semantics = [#tpu.dimension_semantics<arbitrary>], iteration_bounds = array<i64: 1>, scalar_prefetch = 0 : i64, scratch_operands = 0 : i64, tpu.core_type = #tpu.core_type<tc>, window_params = [{pipeline_mode = #tpu.pipeline_mode<synchronous>, transform_indices = @transform_0, window_bounds = array<i64: 16, 32>}, {pipeline_mode = #tpu.pipeline_mode<synchronous>, transform_indices = @transform_1, window_bounds = array<i64: 16, 16>}, {pipeline_mode = #tpu.pipeline_mode<synchronous>, transform_indices = @transform_2, window_bounds = array<i64: 4, 1, 32>}, {pipeline_mode = #tpu.pipeline_mode<synchronous>, transform_indices = @transform_3, window_bounds = array<i64: 2, 16>}, {pipeline_mode = #tpu.pipeline_mode<synchronous>, transform_indices = @transform_4, window_bounds = array<i64: 1, 32>}, {pipeline_mode = #tpu.pipeline_mode<synchronous>, transform_indices = @transform_5, window_bounds = array<i64: 1, 32>}, {pipeline_mode = #tpu.pipeline_mode<synchronous>, transform_indices = @transform_6, window_bounds = array<i64: 2, 32, 96>}, {pipeline_mode = #tpu.pipeline_mode<synchronous>, transform_indices = @transform_7, window_bounds = array<i64: 2, 1, 96>}, {pipeline_mode = #tpu.pipeline_mode<synchronous>, transform_indices = @transform_8, window_bounds = array<i64: 2, 32, 32>}, {pipeline_mode = #tpu.pipeline_mode<synchronous>, transform_indices = @transform_9, window_bounds = array<i64: 2, 1, 32>}, {pipeline_mode = #tpu.pipeline_mode<synchronous>, transform_indices = @transform_10, window_bounds = array<i64: 2, 1, 32>}, {pipeline_mode = #tpu.pipeline_mode<synchronous>, transform_indices = @transform_11, window_bounds = array<i64: 2, 1, 32>}, {pipeline_mode = #tpu.pipeline_mode<synchronous>, transform_indices = @transform_12, window_bounds = array<i64: 2, 32, 64>}, {pipeline_mode = #tpu.pipeline_mode<synchronous>, transform_indices = @transform_13, window_bounds = array<i64: 2, 1, 64>}, {pipeline_mode = #tpu.pipeline_mode<synchronous>, transform_indices = @transform_14, window_bounds = array<i64: 2, 64, 32>}, {pipeline_mode = #tpu.pipeline_mode<synchronous>, transform_indices = @transform_15, window_bounds = array<i64: 2, 1, 32>}, {pipeline_mode = #tpu.pipeline_mode<synchronous>, transform_indices = @transform_16, window_bounds = array<i64: 2, 1, 32>}, {pipeline_mode = #tpu.pipeline_mode<synchronous>, transform_indices = @transform_17, window_bounds = array<i64: 2, 1, 32>}, {pipeline_mode = #tpu.pipeline_mode<synchronous>, transform_indices = @transform_18, window_bounds = array<i64: 32, 32>}, {pipeline_mode = #tpu.pipeline_mode<synchronous>, transform_indices = @transform_19, window_bounds = array<i64: 1, 32>}, {pipeline_mode = #tpu.pipeline_mode<synchronous>, transform_indices = @transform_20, window_bounds = array<i64: 32, 128>}, {pipeline_mode = #tpu.pipeline_mode<synchronous>, transform_indices = @transform_21, window_bounds = array<i64: 1, 128>}, {pipeline_mode = #tpu.pipeline_mode<synchronous>, transform_indices = @transform_22, window_bounds = array<i64: 2, 128>}]} {
    %c0 = arith.constant 0 : index
    %c0_0 = arith.constant 0 : index
    %0 = vector.load %arg1[%c0, %c0_0] : memref<16x32xf32, #tpu.memory_space<vmem>>, vector<16x32xf32>
    %c0_1 = arith.constant 0 : index
    %c0_2 = arith.constant 0 : index
    %1 = vector.load %arg5[%c0_1, %c0_2] : memref<1x32xf32, #tpu.memory_space<vmem>>, vector<1x32xf32>
    %c0_3 = arith.constant 0 : index
    %c0_4 = arith.constant 0 : index
    %2 = vector.load %arg6[%c0_3, %c0_4] : memref<1x32xf32, #tpu.memory_space<vmem>>, vector<1x32xf32>
    %cst = arith.constant dense<0.000000e+00> : vector<16xf32>
    %3 = vector.multi_reduction <add>, %0, %cst [1] : vector<16x32xf32> to vector<16xf32>
    %4 = vector.shape_cast %3 : vector<16xf32> to vector<16x1xf32>
    %cst_5 = arith.constant 3.200000e+01 : f32
    %5 = vector.broadcast %cst_5 : f32 to vector<16x1xf32>
    %6 = arith.divf %4, %5 : vector<16x1xf32>
    %7 = vector.broadcast %6 : vector<16x1xf32> to vector<16x32xf32>
    %8 = arith.subf %0, %7 : vector<16x32xf32>
    %9 = arith.mulf %8, %8 : vector<16x32xf32>
    %cst_6 = arith.constant dense<0.000000e+00> : vector<16xf32>
    %10 = vector.multi_reduction <add>, %9, %cst_6 [1] : vector<16x32xf32> to vector<16xf32>
    %11 = vector.shape_cast %10 : vector<16xf32> to vector<16x1xf32>
    %cst_7 = arith.constant 3.200000e+01 : f32
    %12 = vector.broadcast %cst_7 : f32 to vector<16x1xf32>
    %13 = arith.divf %11, %12 : vector<16x1xf32>
    %14 = vector.broadcast %6 : vector<16x1xf32> to vector<16x32xf32>
    %15 = arith.subf %0, %14 : vector<16x32xf32>
    %cst_8 = arith.constant 9.99999996E-13 : f32
    %16 = vector.broadcast %cst_8 : f32 to vector<16x1xf32>
    %17 = arith.addf %13, %16 : vector<16x1xf32>
    %18 = math.rsqrt %17 : vector<16x1xf32>
    %19 = vector.broadcast %18 : vector<16x1xf32> to vector<16x32xf32>
    %20 = arith.mulf %15, %19 : vector<16x32xf32>
    %21 = vector.broadcast %1 : vector<1x32xf32> to vector<16x32xf32>
    %22 = arith.mulf %20, %21 : vector<16x32xf32>
    %23 = vector.broadcast %2 : vector<1x32xf32> to vector<16x32xf32>
    %24 = arith.addf %22, %23 : vector<16x32xf32>
    %c0_9 = arith.constant 0 : index
    %c0_10 = arith.constant 0 : index
    %25 = vector.load %arg2[%c0_9, %c0_10] : memref<16x16xf32, #tpu.memory_space<vmem>>, vector<16x16xf32>
    %c0_11 = arith.constant 0 : index
    %c0_12 = arith.constant 0 : index
    %c0_13 = arith.constant 0 : index
    %26 = vector.load %arg7[%c0_11, %c0_12, %c0_13] : memref<2x32x96xbf16, #tpu.memory_space<vmem>>, vector<1x32x96xbf16>
    %27 = vector.shape_cast %26 : vector<1x32x96xbf16> to vector<32x96xbf16>
    %c0_14 = arith.constant 0 : index
    %c0_15 = arith.constant 0 : index
    %c0_16 = arith.constant 0 : index
    %28 = vector.load %arg8[%c0_14, %c0_15, %c0_16] : memref<2x1x96xf32, #tpu.memory_space<vmem>>, vector<1x1x96xf32>
    %29 = vector.shape_cast %28 : vector<1x1x96xf32> to vector<1x96xf32>
    %30 = arith.truncf %24 : vector<16x32xf32> to vector<16x32xbf16>
    %cst_17 = arith.constant dense<0.000000e+00> : vector<16x96xf32>
    %31 = tpu.matmul %30, %27, %cst_17 {dimension_numbers = #tpu.dot_dimension_numbers<[1], [0], [0], [1], [0, 0, 1, 1], [], []>} : vector<16x32xbf16>, vector<32x96xbf16>, vector<16x96xf32> -> vector<16x96xf32>
    %32 = vector.broadcast %29 : vector<1x96xf32> to vector<16x96xf32>
    %33 = arith.addf %31, %32 : vector<16x96xf32>
    %34 = vector.extract_strided_slice %33 {offsets = [0, 0], sizes = [16, 32], strides = [1, 1]} : vector<16x96xf32> to vector<16x32xf32>
    %35 = vector.extract_strided_slice %33 {offsets = [0, 32], sizes = [16, 32], strides = [1, 1]} : vector<16x96xf32> to vector<16x32xf32>
    %36 = vector.extract_strided_slice %33 {offsets = [0, 64], sizes = [16, 32], strides = [1, 1]} : vector<16x96xf32> to vector<16x32xf32>
    %cst_18 = arith.constant 0.000000e+00 : f32
    %37 = vector.broadcast %cst_18 : f32 to vector<16x32xf32>
    %c0_19 = arith.constant 0 : index
    %c0_20 = arith.constant 0 : index
    %c0_21 = arith.constant 0 : index
    %38 = vector.load %arg3[%c0_19, %c0_20, %c0_21] : memref<4x1x32xf32, #tpu.memory_space<vmem>>, vector<1x1x32xf32>
    %39 = vector.shape_cast %38 : vector<1x1x32xf32> to vector<1x32xf32>
    %40 = vector.broadcast %39 : vector<1x32xf32> to vector<16x32xf32>
    %41 = arith.mulf %34, %40 : vector<16x32xf32>
    %cst_22 = arith.constant dense<0.000000e+00> : vector<16x16xf32>
    %42 = tpu.matmul %41, %35, %cst_22 {dimension_numbers = #tpu.dot_dimension_numbers<[1], [1], [0], [0], [0, 0, 1, 0], [], []>} : vector<16x32xf32>, vector<16x32xf32>, vector<16x16xf32> -> vector<16x16xf32>
    %cst_23 = arith.constant 0.353553385 : f32
    %43 = vector.broadcast %cst_23 : f32 to vector<16x16xf32>
    %44 = arith.mulf %42, %43 : vector<16x16xf32>
    %45 = arith.addf %44, %25 : vector<16x16xf32>
    %cst_24 = arith.constant dense<0xFF800000> : vector<16xf32>
    %46 = vector.multi_reduction <maximumf>, %45, %cst_24 [1] : vector<16x16xf32> to vector<16xf32>
    %47 = vector.shape_cast %46 : vector<16xf32> to vector<16x1xf32>
    %48 = vector.broadcast %47 : vector<16x1xf32> to vector<16x16xf32>
    %49 = arith.subf %45, %48 : vector<16x16xf32>
    %50 = math.exp %49 : vector<16x16xf32>
    %cst_25 = arith.constant dense<0.000000e+00> : vector<16xf32>
    %51 = vector.multi_reduction <add>, %50, %cst_25 [1] : vector<16x16xf32> to vector<16xf32>
    %52 = vector.shape_cast %51 : vector<16xf32> to vector<16x1xf32>
    %53 = vector.broadcast %52 : vector<16x1xf32> to vector<16x16xf32>
    %54 = arith.divf %50, %53 : vector<16x16xf32>
    %55 = vector.broadcast %39 : vector<1x32xf32> to vector<16x32xf32>
    %56 = arith.mulf %36, %55 : vector<16x32xf32>
    %cst_26 = arith.constant dense<0.000000e+00> : vector<16x32xf32>
    %57 = tpu.matmul %54, %56, %cst_26 {dimension_numbers = #tpu.dot_dimension_numbers<[1], [0], [0], [1], [0, 0, 1, 1], [], []>} : vector<16x16xf32>, vector<16x32xf32>, vector<16x32xf32> -> vector<16x32xf32>
    %58 = arith.addf %37, %57 : vector<16x32xf32>
    %c1 = arith.constant 1 : index
    %c0_27 = arith.constant 0 : index
    %c0_28 = arith.constant 0 : index
    %59 = vector.load %arg3[%c1, %c0_27, %c0_28] : memref<4x1x32xf32, #tpu.memory_space<vmem>>, vector<1x1x32xf32>
    %60 = vector.shape_cast %59 : vector<1x1x32xf32> to vector<1x32xf32>
    %61 = vector.broadcast %60 : vector<1x32xf32> to vector<16x32xf32>
    %62 = arith.mulf %34, %61 : vector<16x32xf32>
    %cst_29 = arith.constant dense<0.000000e+00> : vector<16x16xf32>
    %63 = tpu.matmul %62, %35, %cst_29 {dimension_numbers = #tpu.dot_dimension_numbers<[1], [1], [0], [0], [0, 0, 1, 0], [], []>} : vector<16x32xf32>, vector<16x32xf32>, vector<16x16xf32> -> vector<16x16xf32>
    %cst_30 = arith.constant 0.353553385 : f32
    %64 = vector.broadcast %cst_30 : f32 to vector<16x16xf32>
    %65 = arith.mulf %63, %64 : vector<16x16xf32>
    %66 = arith.addf %65, %25 : vector<16x16xf32>
    %cst_31 = arith.constant dense<0xFF800000> : vector<16xf32>
    %67 = vector.multi_reduction <maximumf>, %66, %cst_31 [1] : vector<16x16xf32> to vector<16xf32>
    %68 = vector.shape_cast %67 : vector<16xf32> to vector<16x1xf32>
    %69 = vector.broadcast %68 : vector<16x1xf32> to vector<16x16xf32>
    %70 = arith.subf %66, %69 : vector<16x16xf32>
    %71 = math.exp %70 : vector<16x16xf32>
    %cst_32 = arith.constant dense<0.000000e+00> : vector<16xf32>
    %72 = vector.multi_reduction <add>, %71, %cst_32 [1] : vector<16x16xf32> to vector<16xf32>
    %73 = vector.shape_cast %72 : vector<16xf32> to vector<16x1xf32>
    %74 = vector.broadcast %73 : vector<16x1xf32> to vector<16x16xf32>
    %75 = arith.divf %71, %74 : vector<16x16xf32>
    %76 = vector.broadcast %60 : vector<1x32xf32> to vector<16x32xf32>
    %77 = arith.mulf %36, %76 : vector<16x32xf32>
    %cst_33 = arith.constant dense<0.000000e+00> : vector<16x32xf32>
    %78 = tpu.matmul %75, %77, %cst_33 {dimension_numbers = #tpu.dot_dimension_numbers<[1], [0], [0], [1], [0, 0, 1, 1], [], []>} : vector<16x16xf32>, vector<16x32xf32>, vector<16x32xf32> -> vector<16x32xf32>
    %79 = arith.addf %58, %78 : vector<16x32xf32>
    %c2 = arith.constant 2 : index
    %c0_34 = arith.constant 0 : index
    %c0_35 = arith.constant 0 : index
    %80 = vector.load %arg3[%c2, %c0_34, %c0_35] : memref<4x1x32xf32, #tpu.memory_space<vmem>>, vector<1x1x32xf32>
    %81 = vector.shape_cast %80 : vector<1x1x32xf32> to vector<1x32xf32>
    %82 = vector.broadcast %81 : vector<1x32xf32> to vector<16x32xf32>
    %83 = arith.mulf %34, %82 : vector<16x32xf32>
    %cst_36 = arith.constant dense<0.000000e+00> : vector<16x16xf32>
    %84 = tpu.matmul %83, %35, %cst_36 {dimension_numbers = #tpu.dot_dimension_numbers<[1], [1], [0], [0], [0, 0, 1, 0], [], []>} : vector<16x32xf32>, vector<16x32xf32>, vector<16x16xf32> -> vector<16x16xf32>
    %cst_37 = arith.constant 0.353553385 : f32
    %85 = vector.broadcast %cst_37 : f32 to vector<16x16xf32>
    %86 = arith.mulf %84, %85 : vector<16x16xf32>
    %87 = arith.addf %86, %25 : vector<16x16xf32>
    %cst_38 = arith.constant dense<0xFF800000> : vector<16xf32>
    %88 = vector.multi_reduction <maximumf>, %87, %cst_38 [1] : vector<16x16xf32> to vector<16xf32>
    %89 = vector.shape_cast %88 : vector<16xf32> to vector<16x1xf32>
    %90 = vector.broadcast %89 : vector<16x1xf32> to vector<16x16xf32>
    %91 = arith.subf %87, %90 : vector<16x16xf32>
    %92 = math.exp %91 : vector<16x16xf32>
    %cst_39 = arith.constant dense<0.000000e+00> : vector<16xf32>
    %93 = vector.multi_reduction <add>, %92, %cst_39 [1] : vector<16x16xf32> to vector<16xf32>
    %94 = vector.shape_cast %93 : vector<16xf32> to vector<16x1xf32>
    %95 = vector.broadcast %94 : vector<16x1xf32> to vector<16x16xf32>
    %96 = arith.divf %92, %95 : vector<16x16xf32>
    %97 = vector.broadcast %81 : vector<1x32xf32> to vector<16x32xf32>
    %98 = arith.mulf %36, %97 : vector<16x32xf32>
    %cst_40 = arith.constant dense<0.000000e+00> : vector<16x32xf32>
    %99 = tpu.matmul %96, %98, %cst_40 {dimension_numbers = #tpu.dot_dimension_numbers<[1], [0], [0], [1], [0, 0, 1, 1], [], []>} : vector<16x16xf32>, vector<16x32xf32>, vector<16x32xf32> -> vector<16x32xf32>
    %100 = arith.addf %79, %99 : vector<16x32xf32>
    %c3 = arith.constant 3 : index
    %c0_41 = arith.constant 0 : index
    %c0_42 = arith.constant 0 : index
    %101 = vector.load %arg3[%c3, %c0_41, %c0_42] : memref<4x1x32xf32, #tpu.memory_space<vmem>>, vector<1x1x32xf32>
    %102 = vector.shape_cast %101 : vector<1x1x32xf32> to vector<1x32xf32>
    %103 = vector.broadcast %102 : vector<1x32xf32> to vector<16x32xf32>
    %104 = arith.mulf %34, %103 : vector<16x32xf32>
    %cst_43 = arith.constant dense<0.000000e+00> : vector<16x16xf32>
    %105 = tpu.matmul %104, %35, %cst_43 {dimension_numbers = #tpu.dot_dimension_numbers<[1], [1], [0], [0], [0, 0, 1, 0], [], []>} : vector<16x32xf32>, vector<16x32xf32>, vector<16x16xf32> -> vector<16x16xf32>
    %cst_44 = arith.constant 0.353553385 : f32
    %106 = vector.broadcast %cst_44 : f32 to vector<16x16xf32>
    %107 = arith.mulf %105, %106 : vector<16x16xf32>
    %108 = arith.addf %107, %25 : vector<16x16xf32>
    %cst_45 = arith.constant dense<0xFF800000> : vector<16xf32>
    %109 = vector.multi_reduction <maximumf>, %108, %cst_45 [1] : vector<16x16xf32> to vector<16xf32>
    %110 = vector.shape_cast %109 : vector<16xf32> to vector<16x1xf32>
    %111 = vector.broadcast %110 : vector<16x1xf32> to vector<16x16xf32>
    %112 = arith.subf %108, %111 : vector<16x16xf32>
    %113 = math.exp %112 : vector<16x16xf32>
    %cst_46 = arith.constant dense<0.000000e+00> : vector<16xf32>
    %114 = vector.multi_reduction <add>, %113, %cst_46 [1] : vector<16x16xf32> to vector<16xf32>
    %115 = vector.shape_cast %114 : vector<16xf32> to vector<16x1xf32>
    %116 = vector.broadcast %115 : vector<16x1xf32> to vector<16x16xf32>
    %117 = arith.divf %113, %116 : vector<16x16xf32>
    %118 = vector.broadcast %102 : vector<1x32xf32> to vector<16x32xf32>
    %119 = arith.mulf %36, %118 : vector<16x32xf32>
    %cst_47 = arith.constant dense<0.000000e+00> : vector<16x32xf32>
    %120 = tpu.matmul %117, %119, %cst_47 {dimension_numbers = #tpu.dot_dimension_numbers<[1], [0], [0], [1], [0, 0, 1, 1], [], []>} : vector<16x16xf32>, vector<16x32xf32>, vector<16x32xf32> -> vector<16x32xf32>
    %121 = arith.addf %100, %120 : vector<16x32xf32>
    %c0_48 = arith.constant 0 : index
    %c0_49 = arith.constant 0 : index
    %c0_50 = arith.constant 0 : index
    %122 = vector.load %arg9[%c0_48, %c0_49, %c0_50] : memref<2x32x32xbf16, #tpu.memory_space<vmem>>, vector<1x32x32xbf16>
    %123 = vector.shape_cast %122 : vector<1x32x32xbf16> to vector<32x32xbf16>
    %c0_51 = arith.constant 0 : index
    %c0_52 = arith.constant 0 : index
    %c0_53 = arith.constant 0 : index
    %124 = vector.load %arg10[%c0_51, %c0_52, %c0_53] : memref<2x1x32xf32, #tpu.memory_space<vmem>>, vector<1x1x32xf32>
    %125 = vector.shape_cast %124 : vector<1x1x32xf32> to vector<1x32xf32>
    %126 = arith.truncf %121 : vector<16x32xf32> to vector<16x32xbf16>
    %cst_54 = arith.constant dense<0.000000e+00> : vector<16x32xf32>
    %127 = tpu.matmul %126, %123, %cst_54 {dimension_numbers = #tpu.dot_dimension_numbers<[1], [0], [0], [1], [0, 0, 1, 1], [], []>} : vector<16x32xbf16>, vector<32x32xbf16>, vector<16x32xf32> -> vector<16x32xf32>
    %128 = vector.broadcast %125 : vector<1x32xf32> to vector<16x32xf32>
    %129 = arith.addf %127, %128 : vector<16x32xf32>
    %130 = arith.addf %129, %24 : vector<16x32xf32>
    %c0_55 = arith.constant 0 : index
    %c0_56 = arith.constant 0 : index
    %c0_57 = arith.constant 0 : index
    %131 = vector.load %arg11[%c0_55, %c0_56, %c0_57] : memref<2x1x32xf32, #tpu.memory_space<vmem>>, vector<1x1x32xf32>
    %132 = vector.shape_cast %131 : vector<1x1x32xf32> to vector<1x32xf32>
    %c0_58 = arith.constant 0 : index
    %c0_59 = arith.constant 0 : index
    %c0_60 = arith.constant 0 : index
    %133 = vector.load %arg12[%c0_58, %c0_59, %c0_60] : memref<2x1x32xf32, #tpu.memory_space<vmem>>, vector<1x1x32xf32>
    %134 = vector.shape_cast %133 : vector<1x1x32xf32> to vector<1x32xf32>
    %cst_61 = arith.constant dense<0.000000e+00> : vector<16xf32>
    %135 = vector.multi_reduction <add>, %130, %cst_61 [1] : vector<16x32xf32> to vector<16xf32>
    %136 = vector.shape_cast %135 : vector<16xf32> to vector<16x1xf32>
    %cst_62 = arith.constant 3.200000e+01 : f32
    %137 = vector.broadcast %cst_62 : f32 to vector<16x1xf32>
    %138 = arith.divf %136, %137 : vector<16x1xf32>
    %139 = vector.broadcast %138 : vector<16x1xf32> to vector<16x32xf32>
    %140 = arith.subf %130, %139 : vector<16x32xf32>
    %141 = arith.mulf %140, %140 : vector<16x32xf32>
    %cst_63 = arith.constant dense<0.000000e+00> : vector<16xf32>
    %142 = vector.multi_reduction <add>, %141, %cst_63 [1] : vector<16x32xf32> to vector<16xf32>
    %143 = vector.shape_cast %142 : vector<16xf32> to vector<16x1xf32>
    %cst_64 = arith.constant 3.200000e+01 : f32
    %144 = vector.broadcast %cst_64 : f32 to vector<16x1xf32>
    %145 = arith.divf %143, %144 : vector<16x1xf32>
    %146 = vector.broadcast %138 : vector<16x1xf32> to vector<16x32xf32>
    %147 = arith.subf %130, %146 : vector<16x32xf32>
    %cst_65 = arith.constant 9.99999996E-13 : f32
    %148 = vector.broadcast %cst_65 : f32 to vector<16x1xf32>
    %149 = arith.addf %145, %148 : vector<16x1xf32>
    %150 = math.rsqrt %149 : vector<16x1xf32>
    %151 = vector.broadcast %150 : vector<16x1xf32> to vector<16x32xf32>
    %152 = arith.mulf %147, %151 : vector<16x32xf32>
    %153 = vector.broadcast %132 : vector<1x32xf32> to vector<16x32xf32>
    %154 = arith.mulf %152, %153 : vector<16x32xf32>
    %155 = vector.broadcast %134 : vector<1x32xf32> to vector<16x32xf32>
    %156 = arith.addf %154, %155 : vector<16x32xf32>
    %c0_66 = arith.constant 0 : index
    %c0_67 = arith.constant 0 : index
    %c0_68 = arith.constant 0 : index
    %157 = vector.load %arg13[%c0_66, %c0_67, %c0_68] : memref<2x32x64xbf16, #tpu.memory_space<vmem>>, vector<1x32x64xbf16>
    %158 = vector.shape_cast %157 : vector<1x32x64xbf16> to vector<32x64xbf16>
    %c0_69 = arith.constant 0 : index
    %c0_70 = arith.constant 0 : index
    %c0_71 = arith.constant 0 : index
    %159 = vector.load %arg14[%c0_69, %c0_70, %c0_71] : memref<2x1x64xf32, #tpu.memory_space<vmem>>, vector<1x1x64xf32>
    %160 = vector.shape_cast %159 : vector<1x1x64xf32> to vector<1x64xf32>
    %161 = arith.truncf %156 : vector<16x32xf32> to vector<16x32xbf16>
    %cst_72 = arith.constant dense<0.000000e+00> : vector<16x64xf32>
    %162 = tpu.matmul %161, %158, %cst_72 {dimension_numbers = #tpu.dot_dimension_numbers<[1], [0], [0], [1], [0, 0, 1, 1], [], []>} : vector<16x32xbf16>, vector<32x64xbf16>, vector<16x64xf32> -> vector<16x64xf32>
    %163 = vector.broadcast %160 : vector<1x64xf32> to vector<16x64xf32>
    %164 = arith.addf %162, %163 : vector<16x64xf32>
    %cst_73 = arith.constant 5.000000e-01 : f32
    %165 = vector.broadcast %cst_73 : f32 to vector<16x64xf32>
    %166 = arith.mulf %165, %164 : vector<16x64xf32>
    %cst_74 = arith.constant 4.471500e-02 : f32
    %167 = vector.broadcast %cst_74 : f32 to vector<16x64xf32>
    %168 = arith.mulf %167, %164 : vector<16x64xf32>
    %169 = arith.mulf %168, %164 : vector<16x64xf32>
    %170 = arith.mulf %169, %164 : vector<16x64xf32>
    %171 = arith.addf %164, %170 : vector<16x64xf32>
    %cst_75 = arith.constant 0.797884583 : f32
    %172 = vector.broadcast %cst_75 : f32 to vector<16x64xf32>
    %173 = arith.mulf %172, %171 : vector<16x64xf32>
    %174 = math.tanh %173 : vector<16x64xf32>
    %cst_76 = arith.constant 1.000000e+00 : f32
    %175 = vector.broadcast %cst_76 : f32 to vector<16x64xf32>
    %176 = arith.addf %175, %174 : vector<16x64xf32>
    %177 = arith.mulf %166, %176 : vector<16x64xf32>
    %c0_77 = arith.constant 0 : index
    %c0_78 = arith.constant 0 : index
    %c0_79 = arith.constant 0 : index
    %178 = vector.load %arg15[%c0_77, %c0_78, %c0_79] : memref<2x64x32xbf16, #tpu.memory_space<vmem>>, vector<1x64x32xbf16>
    %179 = vector.shape_cast %178 : vector<1x64x32xbf16> to vector<64x32xbf16>
    %c0_80 = arith.constant 0 : index
    %c0_81 = arith.constant 0 : index
    %c0_82 = arith.constant 0 : index
    %180 = vector.load %arg16[%c0_80, %c0_81, %c0_82] : memref<2x1x32xf32, #tpu.memory_space<vmem>>, vector<1x1x32xf32>
    %181 = vector.shape_cast %180 : vector<1x1x32xf32> to vector<1x32xf32>
    %182 = arith.truncf %177 : vector<16x64xf32> to vector<16x64xbf16>
    %cst_83 = arith.constant dense<0.000000e+00> : vector<16x32xf32>
    %183 = tpu.matmul %182, %179, %cst_83 {dimension_numbers = #tpu.dot_dimension_numbers<[1], [0], [0], [1], [0, 0, 1, 1], [], []>} : vector<16x64xbf16>, vector<64x32xbf16>, vector<16x32xf32> -> vector<16x32xf32>
    %184 = vector.broadcast %181 : vector<1x32xf32> to vector<16x32xf32>
    %185 = arith.addf %183, %184 : vector<16x32xf32>
    %186 = arith.addf %185, %156 : vector<16x32xf32>
    %c0_84 = arith.constant 0 : index
    %c0_85 = arith.constant 0 : index
    %c0_86 = arith.constant 0 : index
    %187 = vector.load %arg17[%c0_84, %c0_85, %c0_86] : memref<2x1x32xf32, #tpu.memory_space<vmem>>, vector<1x1x32xf32>
    %188 = vector.shape_cast %187 : vector<1x1x32xf32> to vector<1x32xf32>
    %c0_87 = arith.constant 0 : index
    %c0_88 = arith.constant 0 : index
    %c0_89 = arith.constant 0 : index
    %189 = vector.load %arg18[%c0_87, %c0_88, %c0_89] : memref<2x1x32xf32, #tpu.memory_space<vmem>>, vector<1x1x32xf32>
    %190 = vector.shape_cast %189 : vector<1x1x32xf32> to vector<1x32xf32>
    %cst_90 = arith.constant dense<0.000000e+00> : vector<16xf32>
    %191 = vector.multi_reduction <add>, %186, %cst_90 [1] : vector<16x32xf32> to vector<16xf32>
    %192 = vector.shape_cast %191 : vector<16xf32> to vector<16x1xf32>
    %cst_91 = arith.constant 3.200000e+01 : f32
    %193 = vector.broadcast %cst_91 : f32 to vector<16x1xf32>
    %194 = arith.divf %192, %193 : vector<16x1xf32>
    %195 = vector.broadcast %194 : vector<16x1xf32> to vector<16x32xf32>
    %196 = arith.subf %186, %195 : vector<16x32xf32>
    %197 = arith.mulf %196, %196 : vector<16x32xf32>
    %cst_92 = arith.constant dense<0.000000e+00> : vector<16xf32>
    %198 = vector.multi_reduction <add>, %197, %cst_92 [1] : vector<16x32xf32> to vector<16xf32>
    %199 = vector.shape_cast %198 : vector<16xf32> to vector<16x1xf32>
    %cst_93 = arith.constant 3.200000e+01 : f32
    %200 = vector.broadcast %cst_93 : f32 to vector<16x1xf32>
    %201 = arith.divf %199, %200 : vector<16x1xf32>
    %202 = vector.broadcast %194 : vector<16x1xf32> to vector<16x32xf32>
    %203 = arith.subf %186, %202 : vector<16x32xf32>
    %cst_94 = arith.constant 9.99999996E-13 : f32
    %204 = vector.broadcast %cst_94 : f32 to vector<16x1xf32>
    %205 = arith.addf %201, %204 : vector<16x1xf32>
    %206 = math.rsqrt %205 : vector<16x1xf32>
    %207 = vector.broadcast %206 : vector<16x1xf32> to vector<16x32xf32>
    %208 = arith.mulf %203, %207 : vector<16x32xf32>
    %209 = vector.broadcast %188 : vector<1x32xf32> to vector<16x32xf32>
    %210 = arith.mulf %208, %209 : vector<16x32xf32>
    %211 = vector.broadcast %190 : vector<1x32xf32> to vector<16x32xf32>
    %212 = arith.addf %210, %211 : vector<16x32xf32>
    %c1_95 = arith.constant 1 : index
    %c0_96 = arith.constant 0 : index
    %c0_97 = arith.constant 0 : index
    %213 = vector.load %arg7[%c1_95, %c0_96, %c0_97] : memref<2x32x96xbf16, #tpu.memory_space<vmem>>, vector<1x32x96xbf16>
    %214 = vector.shape_cast %213 : vector<1x32x96xbf16> to vector<32x96xbf16>
    %c1_98 = arith.constant 1 : index
    %c0_99 = arith.constant 0 : index
    %c0_100 = arith.constant 0 : index
    %215 = vector.load %arg8[%c1_98, %c0_99, %c0_100] : memref<2x1x96xf32, #tpu.memory_space<vmem>>, vector<1x1x96xf32>
    %216 = vector.shape_cast %215 : vector<1x1x96xf32> to vector<1x96xf32>
    %217 = arith.truncf %212 : vector<16x32xf32> to vector<16x32xbf16>
    %cst_101 = arith.constant dense<0.000000e+00> : vector<16x96xf32>
    %218 = tpu.matmul %217, %214, %cst_101 {dimension_numbers = #tpu.dot_dimension_numbers<[1], [0], [0], [1], [0, 0, 1, 1], [], []>} : vector<16x32xbf16>, vector<32x96xbf16>, vector<16x96xf32> -> vector<16x96xf32>
    %219 = vector.broadcast %216 : vector<1x96xf32> to vector<16x96xf32>
    %220 = arith.addf %218, %219 : vector<16x96xf32>
    %221 = vector.extract_strided_slice %220 {offsets = [0, 0], sizes = [16, 32], strides = [1, 1]} : vector<16x96xf32> to vector<16x32xf32>
    %222 = vector.extract_strided_slice %220 {offsets = [0, 32], sizes = [16, 32], strides = [1, 1]} : vector<16x96xf32> to vector<16x32xf32>
    %223 = vector.extract_strided_slice %220 {offsets = [0, 64], sizes = [16, 32], strides = [1, 1]} : vector<16x96xf32> to vector<16x32xf32>
    %cst_102 = arith.constant 0.000000e+00 : f32
    %224 = vector.broadcast %cst_102 : f32 to vector<16x32xf32>
    %c0_103 = arith.constant 0 : index
    %c0_104 = arith.constant 0 : index
    %c0_105 = arith.constant 0 : index
    %225 = vector.load %arg3[%c0_103, %c0_104, %c0_105] : memref<4x1x32xf32, #tpu.memory_space<vmem>>, vector<1x1x32xf32>
    %226 = vector.shape_cast %225 : vector<1x1x32xf32> to vector<1x32xf32>
    %227 = vector.broadcast %226 : vector<1x32xf32> to vector<16x32xf32>
    %228 = arith.mulf %221, %227 : vector<16x32xf32>
    %cst_106 = arith.constant dense<0.000000e+00> : vector<16x16xf32>
    %229 = tpu.matmul %228, %222, %cst_106 {dimension_numbers = #tpu.dot_dimension_numbers<[1], [1], [0], [0], [0, 0, 1, 0], [], []>} : vector<16x32xf32>, vector<16x32xf32>, vector<16x16xf32> -> vector<16x16xf32>
    %cst_107 = arith.constant 0.353553385 : f32
    %230 = vector.broadcast %cst_107 : f32 to vector<16x16xf32>
    %231 = arith.mulf %229, %230 : vector<16x16xf32>
    %232 = arith.addf %231, %25 : vector<16x16xf32>
    %cst_108 = arith.constant dense<0xFF800000> : vector<16xf32>
    %233 = vector.multi_reduction <maximumf>, %232, %cst_108 [1] : vector<16x16xf32> to vector<16xf32>
    %234 = vector.shape_cast %233 : vector<16xf32> to vector<16x1xf32>
    %235 = vector.broadcast %234 : vector<16x1xf32> to vector<16x16xf32>
    %236 = arith.subf %232, %235 : vector<16x16xf32>
    %237 = math.exp %236 : vector<16x16xf32>
    %cst_109 = arith.constant dense<0.000000e+00> : vector<16xf32>
    %238 = vector.multi_reduction <add>, %237, %cst_109 [1] : vector<16x16xf32> to vector<16xf32>
    %239 = vector.shape_cast %238 : vector<16xf32> to vector<16x1xf32>
    %240 = vector.broadcast %239 : vector<16x1xf32> to vector<16x16xf32>
    %241 = arith.divf %237, %240 : vector<16x16xf32>
    %242 = vector.broadcast %226 : vector<1x32xf32> to vector<16x32xf32>
    %243 = arith.mulf %223, %242 : vector<16x32xf32>
    %cst_110 = arith.constant dense<0.000000e+00> : vector<16x32xf32>
    %244 = tpu.matmul %241, %243, %cst_110 {dimension_numbers = #tpu.dot_dimension_numbers<[1], [0], [0], [1], [0, 0, 1, 1], [], []>} : vector<16x16xf32>, vector<16x32xf32>, vector<16x32xf32> -> vector<16x32xf32>
    %245 = arith.addf %224, %244 : vector<16x32xf32>
    %c1_111 = arith.constant 1 : index
    %c0_112 = arith.constant 0 : index
    %c0_113 = arith.constant 0 : index
    %246 = vector.load %arg3[%c1_111, %c0_112, %c0_113] : memref<4x1x32xf32, #tpu.memory_space<vmem>>, vector<1x1x32xf32>
    %247 = vector.shape_cast %246 : vector<1x1x32xf32> to vector<1x32xf32>
    %248 = vector.broadcast %247 : vector<1x32xf32> to vector<16x32xf32>
    %249 = arith.mulf %221, %248 : vector<16x32xf32>
    %cst_114 = arith.constant dense<0.000000e+00> : vector<16x16xf32>
    %250 = tpu.matmul %249, %222, %cst_114 {dimension_numbers = #tpu.dot_dimension_numbers<[1], [1], [0], [0], [0, 0, 1, 0], [], []>} : vector<16x32xf32>, vector<16x32xf32>, vector<16x16xf32> -> vector<16x16xf32>
    %cst_115 = arith.constant 0.353553385 : f32
    %251 = vector.broadcast %cst_115 : f32 to vector<16x16xf32>
    %252 = arith.mulf %250, %251 : vector<16x16xf32>
    %253 = arith.addf %252, %25 : vector<16x16xf32>
    %cst_116 = arith.constant dense<0xFF800000> : vector<16xf32>
    %254 = vector.multi_reduction <maximumf>, %253, %cst_116 [1] : vector<16x16xf32> to vector<16xf32>
    %255 = vector.shape_cast %254 : vector<16xf32> to vector<16x1xf32>
    %256 = vector.broadcast %255 : vector<16x1xf32> to vector<16x16xf32>
    %257 = arith.subf %253, %256 : vector<16x16xf32>
    %258 = math.exp %257 : vector<16x16xf32>
    %cst_117 = arith.constant dense<0.000000e+00> : vector<16xf32>
    %259 = vector.multi_reduction <add>, %258, %cst_117 [1] : vector<16x16xf32> to vector<16xf32>
    %260 = vector.shape_cast %259 : vector<16xf32> to vector<16x1xf32>
    %261 = vector.broadcast %260 : vector<16x1xf32> to vector<16x16xf32>
    %262 = arith.divf %258, %261 : vector<16x16xf32>
    %263 = vector.broadcast %247 : vector<1x32xf32> to vector<16x32xf32>
    %264 = arith.mulf %223, %263 : vector<16x32xf32>
    %cst_118 = arith.constant dense<0.000000e+00> : vector<16x32xf32>
    %265 = tpu.matmul %262, %264, %cst_118 {dimension_numbers = #tpu.dot_dimension_numbers<[1], [0], [0], [1], [0, 0, 1, 1], [], []>} : vector<16x16xf32>, vector<16x32xf32>, vector<16x32xf32> -> vector<16x32xf32>
    %266 = arith.addf %245, %265 : vector<16x32xf32>
    %c2_119 = arith.constant 2 : index
    %c0_120 = arith.constant 0 : index
    %c0_121 = arith.constant 0 : index
    %267 = vector.load %arg3[%c2_119, %c0_120, %c0_121] : memref<4x1x32xf32, #tpu.memory_space<vmem>>, vector<1x1x32xf32>
    %268 = vector.shape_cast %267 : vector<1x1x32xf32> to vector<1x32xf32>
    %269 = vector.broadcast %268 : vector<1x32xf32> to vector<16x32xf32>
    %270 = arith.mulf %221, %269 : vector<16x32xf32>
    %cst_122 = arith.constant dense<0.000000e+00> : vector<16x16xf32>
    %271 = tpu.matmul %270, %222, %cst_122 {dimension_numbers = #tpu.dot_dimension_numbers<[1], [1], [0], [0], [0, 0, 1, 0], [], []>} : vector<16x32xf32>, vector<16x32xf32>, vector<16x16xf32> -> vector<16x16xf32>
    %cst_123 = arith.constant 0.353553385 : f32
    %272 = vector.broadcast %cst_123 : f32 to vector<16x16xf32>
    %273 = arith.mulf %271, %272 : vector<16x16xf32>
    %274 = arith.addf %273, %25 : vector<16x16xf32>
    %cst_124 = arith.constant dense<0xFF800000> : vector<16xf32>
    %275 = vector.multi_reduction <maximumf>, %274, %cst_124 [1] : vector<16x16xf32> to vector<16xf32>
    %276 = vector.shape_cast %275 : vector<16xf32> to vector<16x1xf32>
    %277 = vector.broadcast %276 : vector<16x1xf32> to vector<16x16xf32>
    %278 = arith.subf %274, %277 : vector<16x16xf32>
    %279 = math.exp %278 : vector<16x16xf32>
    %cst_125 = arith.constant dense<0.000000e+00> : vector<16xf32>
    %280 = vector.multi_reduction <add>, %279, %cst_125 [1] : vector<16x16xf32> to vector<16xf32>
    %281 = vector.shape_cast %280 : vector<16xf32> to vector<16x1xf32>
    %282 = vector.broadcast %281 : vector<16x1xf32> to vector<16x16xf32>
    %283 = arith.divf %279, %282 : vector<16x16xf32>
    %284 = vector.broadcast %268 : vector<1x32xf32> to vector<16x32xf32>
    %285 = arith.mulf %223, %284 : vector<16x32xf32>
    %cst_126 = arith.constant dense<0.000000e+00> : vector<16x32xf32>
    %286 = tpu.matmul %283, %285, %cst_126 {dimension_numbers = #tpu.dot_dimension_numbers<[1], [0], [0], [1], [0, 0, 1, 1], [], []>} : vector<16x16xf32>, vector<16x32xf32>, vector<16x32xf32> -> vector<16x32xf32>
    %287 = arith.addf %266, %286 : vector<16x32xf32>
    %c3_127 = arith.constant 3 : index
    %c0_128 = arith.constant 0 : index
    %c0_129 = arith.constant 0 : index
    %288 = vector.load %arg3[%c3_127, %c0_128, %c0_129] : memref<4x1x32xf32, #tpu.memory_space<vmem>>, vector<1x1x32xf32>
    %289 = vector.shape_cast %288 : vector<1x1x32xf32> to vector<1x32xf32>
    %290 = vector.broadcast %289 : vector<1x32xf32> to vector<16x32xf32>
    %291 = arith.mulf %221, %290 : vector<16x32xf32>
    %cst_130 = arith.constant dense<0.000000e+00> : vector<16x16xf32>
    %292 = tpu.matmul %291, %222, %cst_130 {dimension_numbers = #tpu.dot_dimension_numbers<[1], [1], [0], [0], [0, 0, 1, 0], [], []>} : vector<16x32xf32>, vector<16x32xf32>, vector<16x16xf32> -> vector<16x16xf32>
    %cst_131 = arith.constant 0.353553385 : f32
    %293 = vector.broadcast %cst_131 : f32 to vector<16x16xf32>
    %294 = arith.mulf %292, %293 : vector<16x16xf32>
    %295 = arith.addf %294, %25 : vector<16x16xf32>
    %cst_132 = arith.constant dense<0xFF800000> : vector<16xf32>
    %296 = vector.multi_reduction <maximumf>, %295, %cst_132 [1] : vector<16x16xf32> to vector<16xf32>
    %297 = vector.shape_cast %296 : vector<16xf32> to vector<16x1xf32>
    %298 = vector.broadcast %297 : vector<16x1xf32> to vector<16x16xf32>
    %299 = arith.subf %295, %298 : vector<16x16xf32>
    %300 = math.exp %299 : vector<16x16xf32>
    %cst_133 = arith.constant dense<0.000000e+00> : vector<16xf32>
    %301 = vector.multi_reduction <add>, %300, %cst_133 [1] : vector<16x16xf32> to vector<16xf32>
    %302 = vector.shape_cast %301 : vector<16xf32> to vector<16x1xf32>
    %303 = vector.broadcast %302 : vector<16x1xf32> to vector<16x16xf32>
    %304 = arith.divf %300, %303 : vector<16x16xf32>
    %305 = vector.broadcast %289 : vector<1x32xf32> to vector<16x32xf32>
    %306 = arith.mulf %223, %305 : vector<16x32xf32>
    %cst_134 = arith.constant dense<0.000000e+00> : vector<16x32xf32>
    %307 = tpu.matmul %304, %306, %cst_134 {dimension_numbers = #tpu.dot_dimension_numbers<[1], [0], [0], [1], [0, 0, 1, 1], [], []>} : vector<16x16xf32>, vector<16x32xf32>, vector<16x32xf32> -> vector<16x32xf32>
    %308 = arith.addf %287, %307 : vector<16x32xf32>
    %c1_135 = arith.constant 1 : index
    %c0_136 = arith.constant 0 : index
    %c0_137 = arith.constant 0 : index
    %309 = vector.load %arg9[%c1_135, %c0_136, %c0_137] : memref<2x32x32xbf16, #tpu.memory_space<vmem>>, vector<1x32x32xbf16>
    %310 = vector.shape_cast %309 : vector<1x32x32xbf16> to vector<32x32xbf16>
    %c1_138 = arith.constant 1 : index
    %c0_139 = arith.constant 0 : index
    %c0_140 = arith.constant 0 : index
    %311 = vector.load %arg10[%c1_138, %c0_139, %c0_140] : memref<2x1x32xf32, #tpu.memory_space<vmem>>, vector<1x1x32xf32>
    %312 = vector.shape_cast %311 : vector<1x1x32xf32> to vector<1x32xf32>
    %313 = arith.truncf %308 : vector<16x32xf32> to vector<16x32xbf16>
    %cst_141 = arith.constant dense<0.000000e+00> : vector<16x32xf32>
    %314 = tpu.matmul %313, %310, %cst_141 {dimension_numbers = #tpu.dot_dimension_numbers<[1], [0], [0], [1], [0, 0, 1, 1], [], []>} : vector<16x32xbf16>, vector<32x32xbf16>, vector<16x32xf32> -> vector<16x32xf32>
    %315 = vector.broadcast %312 : vector<1x32xf32> to vector<16x32xf32>
    %316 = arith.addf %314, %315 : vector<16x32xf32>
    %317 = arith.addf %316, %212 : vector<16x32xf32>
    %c1_142 = arith.constant 1 : index
    %c0_143 = arith.constant 0 : index
    %c0_144 = arith.constant 0 : index
    %318 = vector.load %arg11[%c1_142, %c0_143, %c0_144] : memref<2x1x32xf32, #tpu.memory_space<vmem>>, vector<1x1x32xf32>
    %319 = vector.shape_cast %318 : vector<1x1x32xf32> to vector<1x32xf32>
    %c1_145 = arith.constant 1 : index
    %c0_146 = arith.constant 0 : index
    %c0_147 = arith.constant 0 : index
    %320 = vector.load %arg12[%c1_145, %c0_146, %c0_147] : memref<2x1x32xf32, #tpu.memory_space<vmem>>, vector<1x1x32xf32>
    %321 = vector.shape_cast %320 : vector<1x1x32xf32> to vector<1x32xf32>
    %cst_148 = arith.constant dense<0.000000e+00> : vector<16xf32>
    %322 = vector.multi_reduction <add>, %317, %cst_148 [1] : vector<16x32xf32> to vector<16xf32>
    %323 = vector.shape_cast %322 : vector<16xf32> to vector<16x1xf32>
    %cst_149 = arith.constant 3.200000e+01 : f32
    %324 = vector.broadcast %cst_149 : f32 to vector<16x1xf32>
    %325 = arith.divf %323, %324 : vector<16x1xf32>
    %326 = vector.broadcast %325 : vector<16x1xf32> to vector<16x32xf32>
    %327 = arith.subf %317, %326 : vector<16x32xf32>
    %328 = arith.mulf %327, %327 : vector<16x32xf32>
    %cst_150 = arith.constant dense<0.000000e+00> : vector<16xf32>
    %329 = vector.multi_reduction <add>, %328, %cst_150 [1] : vector<16x32xf32> to vector<16xf32>
    %330 = vector.shape_cast %329 : vector<16xf32> to vector<16x1xf32>
    %cst_151 = arith.constant 3.200000e+01 : f32
    %331 = vector.broadcast %cst_151 : f32 to vector<16x1xf32>
    %332 = arith.divf %330, %331 : vector<16x1xf32>
    %333 = vector.broadcast %325 : vector<16x1xf32> to vector<16x32xf32>
    %334 = arith.subf %317, %333 : vector<16x32xf32>
    %cst_152 = arith.constant 9.99999996E-13 : f32
    %335 = vector.broadcast %cst_152 : f32 to vector<16x1xf32>
    %336 = arith.addf %332, %335 : vector<16x1xf32>
    %337 = math.rsqrt %336 : vector<16x1xf32>
    %338 = vector.broadcast %337 : vector<16x1xf32> to vector<16x32xf32>
    %339 = arith.mulf %334, %338 : vector<16x32xf32>
    %340 = vector.broadcast %319 : vector<1x32xf32> to vector<16x32xf32>
    %341 = arith.mulf %339, %340 : vector<16x32xf32>
    %342 = vector.broadcast %321 : vector<1x32xf32> to vector<16x32xf32>
    %343 = arith.addf %341, %342 : vector<16x32xf32>
    %c1_153 = arith.constant 1 : index
    %c0_154 = arith.constant 0 : index
    %c0_155 = arith.constant 0 : index
    %344 = vector.load %arg13[%c1_153, %c0_154, %c0_155] : memref<2x32x64xbf16, #tpu.memory_space<vmem>>, vector<1x32x64xbf16>
    %345 = vector.shape_cast %344 : vector<1x32x64xbf16> to vector<32x64xbf16>
    %c1_156 = arith.constant 1 : index
    %c0_157 = arith.constant 0 : index
    %c0_158 = arith.constant 0 : index
    %346 = vector.load %arg14[%c1_156, %c0_157, %c0_158] : memref<2x1x64xf32, #tpu.memory_space<vmem>>, vector<1x1x64xf32>
    %347 = vector.shape_cast %346 : vector<1x1x64xf32> to vector<1x64xf32>
    %348 = arith.truncf %343 : vector<16x32xf32> to vector<16x32xbf16>
    %cst_159 = arith.constant dense<0.000000e+00> : vector<16x64xf32>
    %349 = tpu.matmul %348, %345, %cst_159 {dimension_numbers = #tpu.dot_dimension_numbers<[1], [0], [0], [1], [0, 0, 1, 1], [], []>} : vector<16x32xbf16>, vector<32x64xbf16>, vector<16x64xf32> -> vector<16x64xf32>
    %350 = vector.broadcast %347 : vector<1x64xf32> to vector<16x64xf32>
    %351 = arith.addf %349, %350 : vector<16x64xf32>
    %cst_160 = arith.constant 5.000000e-01 : f32
    %352 = vector.broadcast %cst_160 : f32 to vector<16x64xf32>
    %353 = arith.mulf %352, %351 : vector<16x64xf32>
    %cst_161 = arith.constant 4.471500e-02 : f32
    %354 = vector.broadcast %cst_161 : f32 to vector<16x64xf32>
    %355 = arith.mulf %354, %351 : vector<16x64xf32>
    %356 = arith.mulf %355, %351 : vector<16x64xf32>
    %357 = arith.mulf %356, %351 : vector<16x64xf32>
    %358 = arith.addf %351, %357 : vector<16x64xf32>
    %cst_162 = arith.constant 0.797884583 : f32
    %359 = vector.broadcast %cst_162 : f32 to vector<16x64xf32>
    %360 = arith.mulf %359, %358 : vector<16x64xf32>
    %361 = math.tanh %360 : vector<16x64xf32>
    %cst_163 = arith.constant 1.000000e+00 : f32
    %362 = vector.broadcast %cst_163 : f32 to vector<16x64xf32>
    %363 = arith.addf %362, %361 : vector<16x64xf32>
    %364 = arith.mulf %353, %363 : vector<16x64xf32>
    %c1_164 = arith.constant 1 : index
    %c0_165 = arith.constant 0 : index
    %c0_166 = arith.constant 0 : index
    %365 = vector.load %arg15[%c1_164, %c0_165, %c0_166] : memref<2x64x32xbf16, #tpu.memory_space<vmem>>, vector<1x64x32xbf16>
    %366 = vector.shape_cast %365 : vector<1x64x32xbf16> to vector<64x32xbf16>
    %c1_167 = arith.constant 1 : index
    %c0_168 = arith.constant 0 : index
    %c0_169 = arith.constant 0 : index
    %367 = vector.load %arg16[%c1_167, %c0_168, %c0_169] : memref<2x1x32xf32, #tpu.memory_space<vmem>>, vector<1x1x32xf32>
    %368 = vector.shape_cast %367 : vector<1x1x32xf32> to vector<1x32xf32>
    %369 = arith.truncf %364 : vector<16x64xf32> to vector<16x64xbf16>
    %cst_170 = arith.constant dense<0.000000e+00> : vector<16x32xf32>
    %370 = tpu.matmul %369, %366, %cst_170 {dimension_numbers = #tpu.dot_dimension_numbers<[1], [0], [0], [1], [0, 0, 1, 1], [], []>} : vector<16x64xbf16>, vector<64x32xbf16>, vector<16x32xf32> -> vector<16x32xf32>
    %371 = vector.broadcast %368 : vector<1x32xf32> to vector<16x32xf32>
    %372 = arith.addf %370, %371 : vector<16x32xf32>
    %373 = arith.addf %372, %343 : vector<16x32xf32>
    %c1_171 = arith.constant 1 : index
    %c0_172 = arith.constant 0 : index
    %c0_173 = arith.constant 0 : index
    %374 = vector.load %arg17[%c1_171, %c0_172, %c0_173] : memref<2x1x32xf32, #tpu.memory_space<vmem>>, vector<1x1x32xf32>
    %375 = vector.shape_cast %374 : vector<1x1x32xf32> to vector<1x32xf32>
    %c1_174 = arith.constant 1 : index
    %c0_175 = arith.constant 0 : index
    %c0_176 = arith.constant 0 : index
    %376 = vector.load %arg18[%c1_174, %c0_175, %c0_176] : memref<2x1x32xf32, #tpu.memory_space<vmem>>, vector<1x1x32xf32>
    %377 = vector.shape_cast %376 : vector<1x1x32xf32> to vector<1x32xf32>
    %cst_177 = arith.constant dense<0.000000e+00> : vector<16xf32>
    %378 = vector.multi_reduction <add>, %373, %cst_177 [1] : vector<16x32xf32> to vector<16xf32>
    %379 = vector.shape_cast %378 : vector<16xf32> to vector<16x1xf32>
    %cst_178 = arith.constant 3.200000e+01 : f32
    %380 = vector.broadcast %cst_178 : f32 to vector<16x1xf32>
    %381 = arith.divf %379, %380 : vector<16x1xf32>
    %382 = vector.broadcast %381 : vector<16x1xf32> to vector<16x32xf32>
    %383 = arith.subf %373, %382 : vector<16x32xf32>
    %384 = arith.mulf %383, %383 : vector<16x32xf32>
    %cst_179 = arith.constant dense<0.000000e+00> : vector<16xf32>
    %385 = vector.multi_reduction <add>, %384, %cst_179 [1] : vector<16x32xf32> to vector<16xf32>
    %386 = vector.shape_cast %385 : vector<16xf32> to vector<16x1xf32>
    %cst_180 = arith.constant 3.200000e+01 : f32
    %387 = vector.broadcast %cst_180 : f32 to vector<16x1xf32>
    %388 = arith.divf %386, %387 : vector<16x1xf32>
    %389 = vector.broadcast %381 : vector<16x1xf32> to vector<16x32xf32>
    %390 = arith.subf %373, %389 : vector<16x32xf32>
    %cst_181 = arith.constant 9.99999996E-13 : f32
    %391 = vector.broadcast %cst_181 : f32 to vector<16x1xf32>
    %392 = arith.addf %388, %391 : vector<16x1xf32>
    %393 = math.rsqrt %392 : vector<16x1xf32>
    %394 = vector.broadcast %393 : vector<16x1xf32> to vector<16x32xf32>
    %395 = arith.mulf %390, %394 : vector<16x32xf32>
    %396 = vector.broadcast %375 : vector<1x32xf32> to vector<16x32xf32>
    %397 = arith.mulf %395, %396 : vector<16x32xf32>
    %398 = vector.broadcast %377 : vector<1x32xf32> to vector<16x32xf32>
    %399 = arith.addf %397, %398 : vector<16x32xf32>
    %c0_182 = arith.constant 0 : index
    %c0_183 = arith.constant 0 : index
    %400 = vector.load %arg4[%c0_182, %c0_183] : memref<2x16xf32, #tpu.memory_space<vmem>>, vector<2x16xf32>
    %cst_184 = arith.constant dense<0.000000e+00> : vector<2x32xf32>
    %401 = tpu.matmul %400, %399, %cst_184 {dimension_numbers = #tpu.dot_dimension_numbers<[1], [0], [0], [1], [0, 0, 1, 1], [], []>} : vector<2x16xf32>, vector<16x32xf32>, vector<2x32xf32> -> vector<2x32xf32>
    %c0_185 = arith.constant 0 : index
    %c0_186 = arith.constant 0 : index
    %402 = vector.load %arg19[%c0_185, %c0_186] : memref<32x32xbf16, #tpu.memory_space<vmem>>, vector<32x32xbf16>
    %c0_187 = arith.constant 0 : index
    %c0_188 = arith.constant 0 : index
    %403 = vector.load %arg20[%c0_187, %c0_188] : memref<1x32xf32, #tpu.memory_space<vmem>>, vector<1x32xf32>
    %404 = arith.truncf %401 : vector<2x32xf32> to vector<2x32xbf16>
    %cst_189 = arith.constant dense<0.000000e+00> : vector<2x32xf32>
    %405 = tpu.matmul %404, %402, %cst_189 {dimension_numbers = #tpu.dot_dimension_numbers<[1], [0], [0], [1], [0, 0, 1, 1], [], []>} : vector<2x32xbf16>, vector<32x32xbf16>, vector<2x32xf32> -> vector<2x32xf32>
    %406 = vector.broadcast %403 : vector<1x32xf32> to vector<2x32xf32>
    %407 = arith.addf %405, %406 : vector<2x32xf32>
    %408 = math.tanh %407 : vector<2x32xf32>
    %c0_190 = arith.constant 0 : index
    %c0_191 = arith.constant 0 : index
    %409 = vector.load %arg21[%c0_190, %c0_191] : memref<32x128xbf16, #tpu.memory_space<vmem>>, vector<32x128xbf16>
    %c0_192 = arith.constant 0 : index
    %c0_193 = arith.constant 0 : index
    %410 = vector.load %arg22[%c0_192, %c0_193] : memref<1x128xf32, #tpu.memory_space<vmem>>, vector<1x128xf32>
    %411 = arith.truncf %408 : vector<2x32xf32> to vector<2x32xbf16>
    %cst_194 = arith.constant dense<0.000000e+00> : vector<2x128xf32>
    %412 = tpu.matmul %411, %409, %cst_194 {dimension_numbers = #tpu.dot_dimension_numbers<[1], [0], [0], [1], [0, 0, 1, 1], [], []>} : vector<2x32xbf16>, vector<32x128xbf16>, vector<2x128xf32> -> vector<2x128xf32>
    %413 = vector.broadcast %410 : vector<1x128xf32> to vector<2x128xf32>
    %414 = arith.addf %412, %413 : vector<2x128xf32>
    %cst_195 = arith.constant dense<0xFF800000> : vector<2xf32>
    %415 = vector.multi_reduction <maximumf>, %414, %cst_195 [1] : vector<2x128xf32> to vector<2xf32>
    %416 = vector.shape_cast %415 : vector<2xf32> to vector<2x1xf32>
    %417 = vector.broadcast %416 : vector<2x1xf32> to vector<2x128xf32>
    %418 = arith.subf %414, %417 : vector<2x128xf32>
    %419 = math.exp %418 : vector<2x128xf32>
    %cst_196 = arith.constant dense<0.000000e+00> : vector<2xf32>
    %420 = vector.multi_reduction <add>, %419, %cst_196 [1] : vector<2x128xf32> to vector<2xf32>
    %421 = vector.shape_cast %420 : vector<2xf32> to vector<2x1xf32>
    %422 = vector.broadcast %421 : vector<2x1xf32> to vector<2x128xf32>
    %423 = arith.divf %419, %422 : vector<2x128xf32>
    %c0_197 = arith.constant 0 : index
    %c0_198 = arith.constant 0 : index
    %424 = vector.load %arg23[%c0_197, %c0_198] : memref<2x128xf32, #tpu.memory_space<vmem>>, vector<2x128xf32>
    tpu.vector_store %arg23[%c0_197, %c0_198], %423 {strides = array<i32>} : memref<2x128xf32, #tpu.memory_space<vmem>>, vector<2x128xf32>,
    return
  }
  func.func @transform_0(%arg0: i32) -> (i32, i32) {
    %c0_i32 = arith.constant 0 : i32
    %c0_i32_0 = arith.constant 0 : i32
    %c0_i32_1 = arith.constant 0 : i32
    return %c0_i32, %c0_i32_0 : i32, i32
  }
  func.func @transform_1(%arg0: i32) -> (i32, i32) {
    %c0_i32 = arith.constant 0 : i32
    %c0_i32_0 = arith.constant 0 : i32
    %c0_i32_1 = arith.constant 0 : i32
    return %c0_i32, %c0_i32_0 : i32, i32
  }
  func.func @transform_2(%arg0: i32) -> (i32, i32, i32) {
    %c0_i32 = arith.constant 0 : i32
    %c0_i32_0 = arith.constant 0 : i32
    %c0_i32_1 = arith.constant 0 : i32
    %c0_i32_2 = arith.constant 0 : i32
    return %c0_i32, %c0_i32_0, %c0_i32_1 : i32, i32, i32
  }
  func.func @transform_3(%arg0: i32) -> (i32, i32) {
    %c0_i32 = arith.constant 0 : i32
    %c0_i32_0 = arith.constant 0 : i32
    %c0_i32_1 = arith.constant 0 : i32
    return %c0_i32, %c0_i32_0 : i32, i32
  }
  func.func @transform_4(%arg0: i32) -> (i32, i32) {
    %c0_i32 = arith.constant 0 : i32
    %c0_i32_0 = arith.constant 0 : i32
    %c0_i32_1 = arith.constant 0 : i32
    return %c0_i32, %c0_i32_0 : i32, i32
  }
  func.func @transform_5(%arg0: i32) -> (i32, i32) {
    %c0_i32 = arith.constant 0 : i32
    %c0_i32_0 = arith.constant 0 : i32
    %c0_i32_1 = arith.constant 0 : i32
    return %c0_i32, %c0_i32_0 : i32, i32
  }
  func.func @transform_6(%arg0: i32) -> (i32, i32, i32) {
    %c0_i32 = arith.constant 0 : i32
    %c0_i32_0 = arith.constant 0 : i32
    %c0_i32_1 = arith.constant 0 : i32
    %c0_i32_2 = arith.constant 0 : i32
    return %c0_i32, %c0_i32_0, %c0_i32_1 : i32, i32, i32
  }
  func.func @transform_7(%arg0: i32) -> (i32, i32, i32) {
    %c0_i32 = arith.constant 0 : i32
    %c0_i32_0 = arith.constant 0 : i32
    %c0_i32_1 = arith.constant 0 : i32
    %c0_i32_2 = arith.constant 0 : i32
    return %c0_i32, %c0_i32_0, %c0_i32_1 : i32, i32, i32
  }
  func.func @transform_8(%arg0: i32) -> (i32, i32, i32) {
    %c0_i32 = arith.constant 0 : i32
    %c0_i32_0 = arith.constant 0 : i32
    %c0_i32_1 = arith.constant 0 : i32
    %c0_i32_2 = arith.constant 0 : i32
    return %c0_i32, %c0_i32_0, %c0_i32_1 : i32, i32, i32
  }
  func.func @transform_9(%arg0: i32) -> (i32, i32, i32) {
    %c0_i32 = arith.constant 0 : i32
    %c0_i32_0 = arith.constant 0 : i32
    %c0_i32_1 = arith.constant 0 : i32
    %c0_i32_2 = arith.constant 0 : i32
    return %c0_i32, %c0_i32_0, %c0_i32_1 : i32, i32, i32
  }
  func.func @transform_10(%arg0: i32) -> (i32, i32, i32) {
    %c0_i32 = arith.constant 0 : i32
    %c0_i32_0 = arith.constant 0 : i32
    %c0_i32_1 = arith.constant 0 : i32
    %c0_i32_2 = arith.constant 0 : i32
    return %c0_i32, %c0_i32_0, %c0_i32_1 : i32, i32, i32
  }
  func.func @transform_11(%arg0: i32) -> (i32, i32, i32) {
    %c0_i32 = arith.constant 0 : i32
    %c0_i32_0 = arith.constant 0 : i32
    %c0_i32_1 = arith.constant 0 : i32
    %c0_i32_2 = arith.constant 0 : i32
    return %c0_i32, %c0_i32_0, %c0_i32_1 : i32, i32, i32
  }
  func.func @transform_12(%arg0: i32) -> (i32, i32, i32) {
    %c0_i32 = arith.constant 0 : i32
    %c0_i32_0 = arith.constant 0 : i32
    %c0_i32_1 = arith.constant 0 : i32
    %c0_i32_2 = arith.constant 0 : i32
    return %c0_i32, %c0_i32_0, %c0_i32_1 : i32, i32, i32
  }
  func.func @transform_13(%arg0: i32) -> (i32, i32, i32) {
    %c0_i32 = arith.constant 0 : i32
    %c0_i32_0 = arith.constant 0 : i32
    %c0_i32_1 = arith.constant 0 : i32
    %c0_i32_2 = arith.constant 0 : i32
    return %c0_i32, %c0_i32_0, %c0_i32_1 : i32, i32, i32
  }
  func.func @transform_14(%arg0: i32) -> (i32, i32, i32) {
    %c0_i32 = arith.constant 0 : i32
    %c0_i32_0 = arith.constant 0 : i32
    %c0_i32_1 = arith.constant 0 : i32
    %c0_i32_2 = arith.constant 0 : i32
    return %c0_i32, %c0_i32_0, %c0_i32_1 : i32, i32, i32
  }
  func.func @transform_15(%arg0: i32) -> (i32, i32, i32) {
    %c0_i32 = arith.constant 0 : i32
    %c0_i32_0 = arith.constant 0 : i32
    %c0_i32_1 = arith.constant 0 : i32
    %c0_i32_2 = arith.constant 0 : i32
    return %c0_i32, %c0_i32_0, %c0_i32_1 : i32, i32, i32
  }
  func.func @transform_16(%arg0: i32) -> (i32, i32, i32) {
    %c0_i32 = arith.constant 0 : i32
    %c0_i32_0 = arith.constant 0 : i32
    %c0_i32_1 = arith.constant 0 : i32
    %c0_i32_2 = arith.constant 0 : i32
    return %c0_i32, %c0_i32_0, %c0_i32_1 : i32, i32, i32
  }
  func.func @transform_17(%arg0: i32) -> (i32, i32, i32) {
    %c0_i32 = arith.constant 0 : i32
    %c0_i32_0 = arith.constant 0 : i32
    %c0_i32_1 = arith.constant 0 : i32
    %c0_i32_2 = arith.constant 0 : i32
    return %c0_i32, %c0_i32_0, %c0_i32_1 : i32, i32, i32
  }
  func.func @transform_18(%arg0: i32) -> (i32, i32) {
    %c0_i32 = arith.constant 0 : i32
    %c0_i32_0 = arith.constant 0 : i32
    %c0_i32_1 = arith.constant 0 : i32
    return %c0_i32, %c0_i32_0 : i32, i32
  }
  func.func @transform_19(%arg0: i32) -> (i32, i32) {
    %c0_i32 = arith.constant 0 : i32
    %c0_i32_0 = arith.constant 0 : i32
    %c0_i32_1 = arith.constant 0 : i32
    return %c0_i32, %c0_i32_0 : i32, i32
  }
  func.func @transform_20(%arg0: i32) -> (i32, i32) {
    %c0_i32 = arith.constant 0 : i32
    %c0_i32_0 = arith.constant 0 : i32
    %c0_i32_1 = arith.constant 0 : i32
    return %c0_i32, %c0_i32_0 : i32, i32
  }
  func.func @transform_21(%arg0: i32) -> (i32, i32) {
    %c0_i32 = arith.constant 0 : i32
    %c0_i32_0 = arith.constant 0 : i32
    %c0_i32_1 = arith.constant 0 : i32
    return %c0_i32, %c0_i32_0 : i32, i32
  }
  func.func @transform_22(%arg0: i32) -> (i32, i32) {
    %c0_i32 = arith.constant 0 : i32
    %c0_i32_0 = arith.constant 0 : i32
    %c0_i32_1 = arith.constant 0 : i32
    return %c0_i32, %c0_i32_0 : i32, i32
  }
}

</mosaic_0001>

<llo_original>
// kernel: bert_base_uncased_forward.1
$region0: #{bert_base_uncased_forward.1}
  #allocation0 [shape = 'u32[]', space=smem, size = 0x4, offset = 0x4, fixed_abs, tag = 'smem constant byte address 0x4 - core index']
  #allocation1 [shape = 'u32[72,128]{1,0:T(1,128)}', space=vmem, size = 0x9000, scoped, tag = 'internal scratch']
  %s0 = inlined_call_operand.vmem [shape: f32[16,32], index: 0, kind: input, shape index: {}]
  %s1 = inlined_call_operand.vmem [shape: f32[16,16], index: 1, kind: input, shape index: {}]
  %s2 = inlined_call_operand.vmem [shape: f32[4,1,32], index: 2, kind: input, shape index: {}]
  %s3 = inlined_call_operand.vmem [shape: f32[2,16], index: 3, kind: input, shape index: {}]
  %s4 = inlined_call_operand.vmem [shape: f32[1,32], index: 4, kind: input, shape index: {}]
  %s5 = inlined_call_operand.vmem [shape: f32[1,32], index: 5, kind: input, shape index: {}]
  %s6 = inlined_call_operand.vmem [shape: bf16[2,32,96], index: 6, kind: input, shape index: {}]
  %s7 = inlined_call_operand.vmem [shape: f32[2,1,96], index: 7, kind: input, shape index: {}]
  %s8 = inlined_call_operand.vmem [shape: bf16[2,32,32], index: 8, kind: input, shape index: {}]
  %s9 = inlined_call_operand.vmem [shape: f32[2,1,32], index: 9, kind: input, shape index: {}]
  %s10 = inlined_call_operand.vmem [shape: f32[2,1,32], index: 10, kind: input, shape index: {}]
  %s11 = inlined_call_operand.vmem [shape: f32[2,1,32], index: 11, kind: input, shape index: {}]
  %s12 = inlined_call_operand.vmem [shape: bf16[2,32,64], index: 12, kind: input, shape index: {}]
  %s13 = inlined_call_operand.vmem [shape: f32[2,1,64], index: 13, kind: input, shape index: {}]
  %s14 = inlined_call_operand.vmem [shape: bf16[2,64,32], index: 14, kind: input, shape index: {}]
  %s15 = inlined_call_operand.vmem [shape: f32[2,1,32], index: 15, kind: input, shape index: {}]
  %s16 = inlined_call_operand.vmem [shape: f32[2,1,32], index: 16, kind: input, shape index: {}]
  %s17 = inlined_call_operand.vmem [shape: f32[2,1,32], index: 17, kind: input, shape index: {}]
  %s18 = inlined_call_operand.vmem [shape: bf16[32,32], index: 18, kind: input, shape index: {}]
  %s19 = inlined_call_operand.vmem [shape: f32[1,32], index: 19, kind: input, shape index: {}]
  %s20 = inlined_call_operand.vmem [shape: bf16[32,128], index: 20, kind: input, shape index: {}]
  %s21 = inlined_call_operand.vmem [shape: f32[1,128], index: 21, kind: input, shape index: {}]
  %s22 = inlined_call_operand.hbm [shape: f32[2,128], index: 22, kind: output, shape index: {}]
  %s23 = sld [smem:[#allocation0]]
  $region98: #{bert_base_uncased_forward.1} parent=0
    _
  %s25 = ssub.s32 1, %s23
  %s26 = scalar_select 0, %s25, %s23
  $region1: #{bert_base_uncased_forward.1} parent=0
    #allocation2 [shape = 'u8[1024]{0}', space=vmem, size = 0x400, scoped, tag = 'output window, operand 0, single buffered']
    #allocation3 [shape = 's32[1]{0}', space=sflag, size = 0x4, scoped, tag = 'scoped memory for bert_base_uncased_forward.1']
    %27 = vsyncpa [#allocation3], 0
    // Predicated region
    $region2: #{bert_base_uncased_forward.1} parent=1 // pred_check
      _
    $region3: #{bert_base_uncased_forward.1} parent=1 // pred_check_branch
      %29 = sbr.rel (0) target = $region5
    $region4: #{bert_base_uncased_forward.1} parent=1 // pred_region
      _
    $region5: #{bert_base_uncased_forward.1} parent=1 // pred_fallthru
      _
    // Predicated region
    $region6: #{bert_base_uncased_forward.1} parent=1 // pred_check
      _
    $region7: #{bert_base_uncased_forward.1} parent=1 // pred_check_branch
      %31 = sbr.rel (0) target = $region9
    $region8: #{bert_base_uncased_forward.1} parent=1 // pred_region
      _
    $region9: #{bert_base_uncased_forward.1} parent=1 // pred_fallthru
      _
    // Predicated region
    $region10: #{bert_base_uncased_forward.1} parent=1 // pred_check
      _
    $region11: #{bert_base_uncased_forward.1} parent=1 // pred_check_branch
      %33 = sbr.rel (0) target = $region13
    $region12: #{bert_base_uncased_forward.1} parent=1 // pred_region
      _
    $region13: #{bert_base_uncased_forward.1} parent=1 // pred_fallthru
      _
    // Predicated region
    $region14: #{bert_base_uncased_forward.1} parent=1 // pred_check
      _
    $region15: #{bert_base_uncased_forward.1} parent=1 // pred_check_branch
      %35 = sbr.rel (0) target = $region17
    $region16: #{bert_base_uncased_forward.1} parent=1 // pred_region
      _
    $region17: #{bert_base_uncased_forward.1} parent=1 // pred_fallthru
      _
    // Predicated region
    $region18: #{bert_base_uncased_forward.1} parent=1 // pred_check
      _
    $region19: #{bert_base_uncased_forward.1} parent=1 // pred_check_branch
      %37 = sbr.rel (0) target = $region21
    $region20: #{bert_base_uncased_forward.1} parent=1 // pred_region
      _
    $region21: #{bert_base_uncased_forward.1} parent=1 // pred_fallthru
      _
    // Predicated region
    $region22: #{bert_base_uncased_forward.1} parent=1 // pred_check
      _
    $region23: #{bert_base_uncased_forward.1} parent=1 // pred_check_branch
      %39 = sbr.rel (0) target = $region25
    $region24: #{bert_base_uncased_forward.1} parent=1 // pred_region
      _
    $region25: #{bert_base_uncased_forward.1} parent=1 // pred_fallthru
      _
    // Predicated region
    $region26: #{bert_base_uncased_forward.1} parent=1 // pred_check
      _
    $region27: #{bert_base_uncased_forward.1} parent=1 // pred_check_branch
      %41 = sbr.rel (0) target = $region29
    $region28: #{bert_base_uncased_forward.1} parent=1 // pred_region
      _
    $region29: #{bert_base_uncased_forward.1} parent=1 // pred_fallthru
      _
    // Predicated region
    $region30: #{bert_base_uncased_forward.1} parent=1 // pred_check
      _
    $region31: #{bert_base_uncased_forward.1} parent=1 // pred_check_branch
      %43 = sbr.rel (0) target = $region33
    $region32: #{bert_base_uncased_forward.1} parent=1 // pred_region
      _
    $region33: #{bert_base_uncased_forward.1} parent=1 // pred_fallthru
      _
    // Predicated region
    $region34: #{bert_base_uncased_forward.1} parent=1 // pred_check
      _
    $region35: #{bert_base_uncased_forward.1} parent=1 // pred_check_branch
      %45 = sbr.rel (0) target = $region37
    $region36: #{bert_base_uncased_forward.1} parent=1 // pred_region
      _
    $region37: #{bert_base_uncased_forward.1} parent=1 // pred_fallthru
      _
    // Predicated region
    $region38: #{bert_base_uncased_forward.1} parent=1 // pred_check
      _
    $region39: #{bert_base_uncased_forward.1} parent=1 // pred_check_branch
      %47 = sbr.rel (0) target = $region41
    $region40: #{bert_base_uncased_forward.1} parent=1 // pred_region
      _
    $region41: #{bert_base_uncased_forward.1} parent=1 // pred_fallthru
      _
    // Predicated region
    $region42: #{bert_base_uncased_forward.1} parent=1 // pred_check
      _
    $region43: #{bert_base_uncased_forward.1} parent=1 // pred_check_branch
      %49 = sbr.rel (0) target = $region45
    $region44: #{bert_base_uncased_forward.1} parent=1 // pred_region
      _
    $region45: #{bert_base_uncased_forward.1} parent=1 // pred_fallthru
      _
    // Predicated region
    $region46: #{bert_base_uncased_forward.1} parent=1 // pred_check
      _
    $region47: #{bert_base_uncased_forward.1} parent=1 // pred_check_branch
      %51 = sbr.rel (0) target = $region49
    $region48: #{bert_base_uncased_forward.1} parent=1 // pred_region
      _
    $region49: #{bert_base_uncased_forward.1} parent=1 // pred_fallthru
      _
    // Predicated region
    $region50: #{bert_base_uncased_forward.1} parent=1 // pred_check
      _
    $region51: #{bert_base_uncased_forward.1} parent=1 // pred_check_branch
      %53 = sbr.rel (0) target = $region53
    $region52: #{bert_base_uncased_forward.1} parent=1 // pred_region
      _
    $region53: #{bert_base_uncased_forward.1} parent=1 // pred_fallthru
      _
    // Predicated region
    $region54: #{bert_base_uncased_forward.1} parent=1 // pred_check
      _
    $region55: #{bert_base_uncased_forward.1} parent=1 // pred_check_branch
      %55 = sbr.rel (0) target = $region57
    $region56: #{bert_base_uncased_forward.1} parent=1 // pred_region
      _
    $region57: #{bert_base_uncased_forward.1} parent=1 // pred_fallthru
      _
    // Predicated region
    $region58: #{bert_base_uncased_forward.1} parent=1 // pred_check
      _
    $region59: #{bert_base_uncased_forward.1} parent=1 // pred_check_branch
      %57 = sbr.rel (0) target = $region61
    $region60: #{bert_base_uncased_forward.1} parent=1 // pred_region
      _
    $region61: #{bert_base_uncased_forward.1} parent=1 // pred_fallthru
      _
    // Predicated region
    $region62: #{bert_base_uncased_forward.1} parent=1 // pred_check
      _
    $region63: #{bert_base_uncased_forward.1} parent=1 // pred_check_branch
      %59 = sbr.rel (0) target = $region65
    $region64: #{bert_base_uncased_forward.1} parent=1 // pred_region
      _
    $region65: #{bert_base_uncased_forward.1} parent=1 // pred_fallthru
      _
    // Predicated region
    $region66: #{bert_base_uncased_forward.1} parent=1 // pred_check
      _
    $region67: #{bert_base_uncased_forward.1} parent=1 // pred_check_branch
      %61 = sbr.rel (0) target = $region69
    $region68: #{bert_base_uncased_forward.1} parent=1 // pred_region
      _
    $region69: #{bert_base_uncased_forward.1} parent=1 // pred_fallthru
      _
    // Predicated region
    $region70: #{bert_base_uncased_forward.1} parent=1 // pred_check
      _
    $region71: #{bert_base_uncased_forward.1} parent=1 // pred_check_branch
      %63 = sbr.rel (0) target = $region73
    $region72: #{bert_base_uncased_forward.1} parent=1 // pred_region
      _
    $region73: #{bert_base_uncased_forward.1} parent=1 // pred_fallthru
      _
    // Predicated region
    $region74: #{bert_base_uncased_forward.1} parent=1 // pred_check
      _
    $region75: #{bert_base_uncased_forward.1} parent=1 // pred_check_branch
      %65 = sbr.rel (0) target = $region77
    $region76: #{bert_base_uncased_forward.1} parent=1 // pred_region
      _
    $region77: #{bert_base_uncased_forward.1} parent=1 // pred_fallthru
      _
    // Predicated region
    $region78: #{bert_base_uncased_forward.1} parent=1 // pred_check
      _
    $region79: #{bert_base_uncased_forward.1} parent=1 // pred_check_branch
      %67 = sbr.rel (0) target = $region81
    $region80: #{bert_base_uncased_forward.1} parent=1 // pred_region
      _
    $region81: #{bert_base_uncased_forward.1} parent=1 // pred_fallthru
      _
    // Predicated region
    $region82: #{bert_base_uncased_forward.1} parent=1 // pred_check
      _
    $region83: #{bert_base_uncased_forward.1} parent=1 // pred_check_branch
      %69 = sbr.rel (0) target = $region85
    $region84: #{bert_base_uncased_forward.1} parent=1 // pred_region
      _
    $region85: #{bert_base_uncased_forward.1} parent=1 // pred_fallthru
      _
    // Predicated region
    $region86: #{bert_base_uncased_forward.1} parent=1 // pred_check
      _
    $region87: #{bert_base_uncased_forward.1} parent=1 // pred_check_branch
      %71 = sbr.rel (0) target = $region89
    $region88: #{bert_base_uncased_forward.1} parent=1 // pred_region
      _
    $region89: #{bert_base_uncased_forward.1} parent=1 // pred_fallthru
      _
    %v73 = vld [vmem:[%s0] sm:$0xff]
    %v74 = vld [vmem:[%s0 + $0x8] sm:$0xff]
    %v75 = vld [vmem:[%s4] sm:$0x1]
    %v76 = vld [vmem:[%s5] sm:$0x1]
    %vm77 = vcmask 261120
    %v78 = vsel %vm77, %v73, 0.0
    %79 = vadd.xlane.f32.xlu0 %v78
    %v80 = vpop.xlane.xlu0 %79
    %v81 = vsel %vm77, %v74, 0.0
    %82 = vadd.xlane.f32.xlu0 %v81
    %v83 = vpop.xlane.xlu0 %82
    %v84 = vrcp.pop 32.0
    %v85 = vmul.f32 32.0, %v84
    %v86 = vsub.f32 1.0, %v85
    %v87 = vmul.f32 %v84, %v86
    %v88 = vadd.f32 %v84, %v87
    %vm89 = vweird.f32 %v84
    %v90 = vsel %vm89, %v84, %v88
    %v91 = vmul.f32 %v80, %v90
    %v92 = vmul.f32 %v83, %v90
    %v93 = vsub.f32 %v73, %v91
    %v94 = vsub.f32 %v74, %v92
    %v95 = vmul.f32 %v93, %v93
    %v96 = vmul.f32 %v94, %v94
    %v97 = vsel %vm77, %v95, 0.0
    %98 = vadd.xlane.f32.xlu0 %v97
    %v99 = vpop.xlane.xlu0 %98
    %v100 = vsel %vm77, %v96, 0.0
    %101 = vadd.xlane.f32.xlu0 %v100
    %v102 = vpop.xlane.xlu0 %101
    %v103 = vmul.f32 %v99, %v90
    %v104 = vmul.f32 %v102, %v90
    %v105 = vadd.f32 %v103, 1e-12
    %v106 = vadd.f32 %v104, 1e-12
    %v107 = vrsqrt.pop %v105
    %v108 = vmul.f32 %v107, %v105
    %v109 = vmul.f32 %v108, %v107
    %v110 = vmul.f32 0.5, %v109
    %v111 = vsub.f32 1.5, %v110
    %v112 = vmul.f32 %v107, %v111
    %vm113 = vweird.f32 %v105
    %vm114 = vweird.f32 %v107
    %vm115 = vmor %vm113, %vm114
    %v116 = vsel %vm115, %v107, %v112
    %v117 = vrsqrt.pop %v106
    %v118 = vmul.f32 %v117, %v106
    %v119 = vmul.f32 %v118, %v117
    %v120 = vmul.f32 0.5, %v119
    %v121 = vsub.f32 1.5, %v120
    %v122 = vmul.f32 %v117, %v121
    %vm123 = vweird.f32 %v106
    %vm124 = vweird.f32 %v117
    %vm125 = vmor %vm123, %vm124
    %v126 = vsel %vm125, %v117, %v122
    %v127 = vmul.f32 %v93, %v116
    %v128 = vmul.f32 %v94, %v126
    %v130 = vperm.slane %v75, 0
    %v132 = vmul.f32 %v127, %v130
    %v133 = vmul.f32 %v128, %v130
    %v135 = vperm.slane %v76, 0
    %v137 = vadd.f32 %v132, %v135
    %v138 = vadd.f32 %v133, %v135
    %v139 = vld [vmem:[%s1] sm:$0xff]
    %v140 = vld [vmem:[%s1 + $0x8] sm:$0xff]
    %v141 = vld [vmem:[%s6] sm:$0xf]
    %v142 = vld [vmem:[%s6 + $0x4] sm:$0xf]
    %v143 = vld [vmem:[%s6 + $0x8] sm:$0xf]
    %v144 = vld [vmem:[%s6 + $0xc] sm:$0xf]
    %v145 = vld [vmem:[%s7] sm:$0x1]
    %v146 = vpack.c.bf16 %v138, %v137
    %v148 = vperm.slane %v145, 0
    %v154 = vunpack.c.l.b16 %v141
    %v155 = vunpack.c.l.b16 %v142
    %v156 = vunpack.c.l.b16 %v143
    %v157 = vunpack.c.l.b16 %v144
    %v158 = vpack.c.b16 %v155, %v154
    %v159 = vpack.c.b16 %v157, %v156
    %v163 = vsel %vm77, %v146, 0
    %165 = vmatpush.bf16.msra.mxu0 0
    %166 = vmatpush.bf16.msra.mxu0 0
    %167 = vmatpush.bf16.msra.mxu0 0
    %168 = vmatpush.bf16.msra.mxu0 0
    %169 = vmatpush.bf16.msra.mxu0 0
    %170 = vmatpush.bf16.msra.mxu0 0
    %171 = vmatpush.bf16.msra.mxu0 %v159
    %172 = vmatpush.bf16.msra.mxu0 %v158
    %173 = vmatmul.bf16.gmra.mxu0 %v163
    %v174 = vpop.f32.mrf.mxu0
    %v175 = vadd.f32 %v148, %v174
    %v176 = vpop.f32.mrf.mxu0
    %v177 = vadd.f32 %v148, %v176
    %178 = vdwg.mxu0
    %v179 = vld [vmem:[%s2] sm:$0x1]
    %v181 = vperm.slane %v179, 0
    %v183 = vmul.f32 %v175, %v181
    %v184 = vmul.f32 %v177, %v181
    %187 = vrot.lane.b32.xlu0 %v175, 96
    %v188 = vpop.permute.xlu0 %187
    %189 = vrot.lane.b32.xlu0 %v177, 96
    %v190 = vpop.permute.xlu0 %189
    %v192 = vsel %vm77, %v183, 0
    %v195 = vsel %vm77, %v184, 0
    %v197 = vsel %vm77, %v188, 0
    %v199 = vsel %vm77, %v190, 0
    %201 = vmatpush.xpose.msra.mxu0 0.0
    %202 = vmatpush.xpose.msra.mxu0 0.0
    %203 = vmatpush.xpose.msra.mxu0 0.0
    %204 = vmatpush.xpose.msra.mxu0 0.0
    %205 = vmatpush.xpose.msra.mxu0 0.0
    %206 = vmatpush.xpose.msra.mxu0 0.0
    %207 = vmatpush.xpose.msra.mxu0 0.0
    %208 = vmatpush.xpose.msra.mxu0 0.0
    %209 = vmatpush.xpose.msra.mxu0 0.0
    %210 = vmatpush.xpose.msra.mxu0 0.0
    %211 = vmatpush.xpose.msra.mxu0 0.0
    %212 = vmatpush.xpose.msra.mxu0 0.0
    %213 = vmatpush.xpose.msra.mxu0 0.0
    %214 = vmatpush.xpose.msra.mxu0 0.0
    %215 = vmatpush.xpose.msra.mxu0 %v199
    %216 = vmatpush.xpose.msra.mxu0 %v197
    %217 = vmatmul.f32.gmra.mxu0 %v192
    %v218 = vpop.f32.mrf.mxu0
    %v219 = vadd.f32 0.0, %v218
    %220 = vmatmul.f32.gmra.mxu0 %v195
    %v221 = vpop.f32.mrf.mxu0
    %v222 = vadd.f32 0.0, %v221
    %223 = vdwg.mxu0
    %v224 = vmul.f32 %v219, 0.35355338
    %v225 = vmul.f32 %v222, 0.35355338
    %v226 = vadd.f32 %v224, %v139
    %v227 = vadd.f32 %v225, %v140
    %vm228 = vcmask 130048
    %v229 = vsel %vm228, %v226, -inf
    %230 = vmax.xlane.f32.xlu0 %v229
    %v231 = vpop.xlane.xlu0 %230
    %v232 = vsel %vm228, %v227, -inf
    %233 = vmax.xlane.f32.xlu0 %v232
    %v234 = vpop.xlane.xlu0 %233
    %v235 = vsub.f32 %v226, %v231
    %v236 = vsub.f32 %v227, %v234
    %v237 = vmul.f32 %v235, 1.442695
    %v238 = vpow.pop %v237
    %v239 = vmul.f32 %v236, 1.442695
    %v240 = vpow.pop %v239
    %v241 = vsel %vm228, %v238, 0.0
    %242 = vadd.xlane.f32.xlu0 %v241
    %v243 = vpop.xlane.xlu0 %242
    %v244 = vsel %vm228, %v240, 0.0
    %245 = vadd.xlane.f32.xlu0 %v244
    %v246 = vpop.xlane.xlu0 %245
    %v247 = vrcp.pop %v243
    %v248 = vmul.f32 %v243, %v247
    %v249 = vsub.f32 1.0, %v248
    %v250 = vmul.f32 %v247, %v249
    %v251 = vadd.f32 %v247, %v250
    %vm252 = vweird.f32 %v243
    %vm253 = vweird.f32 %v247
    %vm254 = vmor %vm252, %vm253
    %v255 = vsel %vm254, %v247, %v251
    %v256 = vand.u32 2147483647, %v243
    %vm257 = vcmp.eq.f32.partialorder %v256, 8.507059e+37
    %v258 = vand.u32 %v243, 2147483648
    %v259 = vor.u32 1.1754944e-38, %v258
    %v260 = vsel %vm257, %v259, %v255
    %v261 = vmul.f32 %v238, %v260
    %v262 = vrcp.pop %v246
    %v263 = vmul.f32 %v246, %v262
    %v264 = vsub.f32 1.0, %v263
    %v265 = vmul.f32 %v262, %v264
    %v266 = vadd.f32 %v262, %v265
    %vm267 = vweird.f32 %v246
    %vm268 = vweird.f32 %v262
    %vm269 = vmor %vm267, %vm268
    %v270 = vsel %vm269, %v262, %v266
    %v271 = vand.u32 2147483647, %v246
    %vm272 = vcmp.eq.f32.partialorder %v271, 8.507059e+37
    %v273 = vand.u32 %v246, 2147483648
    %v274 = vor.u32 1.1754944e-38, %v273
    %v275 = vsel %vm272, %v274, %v270
    %v276 = vmul.f32 %v240, %v275
    %277 = vrot.lane.b32.xlu0 %v181, 64
    %v278 = vpop.permute.xlu0 %277
    %v280 = vmul.f32 %v175, %v278
    %v281 = vmul.f32 %v177, %v278
    %s282 = scalar_lea.vmem %s2, 1
    %v283 = vld [vmem:[%s282] sm:$0x1]
    %v285 = vperm.slane %v283, 0
    %v287 = vmul.f32 %v175, %v285
    %v288 = vmul.f32 %v177, %v285
    %v290 = vsel %vm77, %v287, 0
    %v293 = vsel %vm77, %v288, 0
    %295 = vmatpush.xpose.msra.mxu0 0.0
    %296 = vmatpush.xpose.msra.mxu0 0.0
    %297 = vmatpush.xpose.msra.mxu0 0.0
    %298 = vmatpush.xpose.msra.mxu0 0.0
    %299 = vmatpush.xpose.msra.mxu0 0.0
    %300 = vmatpush.xpose.msra.mxu0 0.0
    %301 = vmatpush.xpose.msra.mxu0 0.0
    %302 = vmatpush.xpose.msra.mxu0 0.0
    %303 = vmatpush.xpose.msra.mxu0 0.0
    %304 = vmatpush.xpose.msra.mxu0 0.0
    %305 = vmatpush.xpose.msra.mxu0 0.0
    %306 = vmatpush.xpose.msra.mxu0 0.0
    %307 = vmatpush.xpose.msra.mxu0 0.0
    %308 = vmatpush.xpose.msra.mxu0 0.0
    %309 = vmatpush.xpose.msra.mxu0 %v199
    %310 = vmatpush.xpose.msra.mxu0 %v197
    %311 = vmatmul.f32.gmra.mxu0 %v290
    %v312 = vpop.f32.mrf.mxu0
    %v313 = vadd.f32 0.0, %v312
    %314 = vmatmul.f32.gmra.mxu0 %v293
    %v315 = vpop.f32.mrf.mxu0
    %v316 = vadd.f32 0.0, %v315
    %317 = vdwg.mxu0
    %v318 = vmul.f32 %v313, 0.35355338
    %v319 = vmul.f32 %v316, 0.35355338
    %v320 = vadd.f32 %v318, %v139
    %v321 = vadd.f32 %v319, %v140
    %v322 = vsel %vm228, %v320, -inf
    %323 = vmax.xlane.f32.xlu0 %v322
    %v324 = vpop.xlane.xlu0 %323
    %v325 = vsel %vm228, %v321, -inf
    %326 = vmax.xlane.f32.xlu0 %v325
    %v327 = vpop.xlane.xlu0 %326
    %v328 = vsub.f32 %v320, %v324
    %v329 = vsub.f32 %v321, %v327
    %v330 = vmul.f32 %v328, 1.442695
    %v331 = vpow.pop %v330
    %v332 = vmul.f32 %v329, 1.442695
    %v333 = vpow.pop %v332
    %v334 = vsel %vm228, %v331, 0.0
    %335 = vadd.xlane.f32.xlu0 %v334
    %v336 = vpop.xlane.xlu0 %335
    %v337 = vsel %vm228, %v333, 0.0
    %338 = vadd.xlane.f32.xlu0 %v337
    %v339 = vpop.xlane.xlu0 %338
    %v340 = vrcp.pop %v336
    %v341 = vmul.f32 %v336, %v340
    %v342 = vsub.f32 1.0, %v341
    %v343 = vmul.f32 %v340, %v342
    %v344 = vadd.f32 %v340, %v343
    %vm345 = vweird.f32 %v336
    %vm346 = vweird.f32 %v340
    %vm347 = vmor %vm345, %vm346
    %v348 = vsel %vm347, %v340, %v344
    %v349 = vand.u32 2147483647, %v336
    %vm350 = vcmp.eq.f32.partialorder %v349, 8.507059e+37
    %v351 = vand.u32 %v336, 2147483648
    %v352 = vor.u32 1.1754944e-38, %v351
    %v353 = vsel %vm350, %v352, %v348
    %v354 = vmul.f32 %v331, %v353
    %v355 = vrcp.pop %v339
    %v356 = vmul.f32 %v339, %v355
    %v357 = vsub.f32 1.0, %v356
    %v358 = vmul.f32 %v355, %v357
    %v359 = vadd.f32 %v355, %v358
    %vm360 = vweird.f32 %v339
    %vm361 = vweird.f32 %v355
    %vm362 = vmor %vm360, %vm361
    %v363 = vsel %vm362, %v355, %v359
    %v364 = vand.u32 2147483647, %v339
    %vm365 = vcmp.eq.f32.partialorder %v364, 8.507059e+37
    %v366 = vand.u32 %v339, 2147483648
    %v367 = vor.u32 1.1754944e-38, %v366
    %v368 = vsel %vm365, %v367, %v363
    %v369 = vmul.f32 %v333, %v368
    %370 = vrot.lane.b32.xlu0 %v285, 64
    %v371 = vpop.permute.xlu0 %370
    %v373 = vmul.f32 %v175, %v371
    %v374 = vmul.f32 %v177, %v371
    %377 = vrot.lane.b32.xlu0 %v373, 64
    %v378 = vpop.permute.xlu0 %377
    %379 = vrot.lane.b32.xlu0 %v374, 64
    %v380 = vpop.permute.xlu0 %379
    %v384 = vsel %vm228, %v354, 0
    %v387 = vsel %vm228, %v369, 0
    %389 = vmatpush.msra.mxu0 0.0
    %390 = vmatpush.msra.mxu0 0.0
    %391 = vmatpush.msra.mxu0 0.0
    %392 = vmatpush.msra.mxu0 0.0
    %393 = vmatpush.msra.mxu0 0.0
    %394 = vmatpush.msra.mxu0 0.0
    %395 = vmatpush.msra.mxu0 0.0
    %396 = vmatpush.msra.mxu0 0.0
    %397 = vmatpush.msra.mxu0 0.0
    %398 = vmatpush.msra.mxu0 0.0
    %399 = vmatpush.msra.mxu0 0.0
    %400 = vmatpush.msra.mxu0 0.0
    %401 = vmatpush.msra.mxu0 0.0
    %402 = vmatpush.msra.mxu0 0.0
    %403 = vmatpush.msra.mxu0 %v380
    %404 = vmatpush.msra.mxu0 %v378
    %405 = vmatmul.f32.gmra.mxu0 %v384
    %v406 = vpop.f32.mrf.mxu0
    %v407 = vadd.f32 0.0, %v406
    %408 = vmatmul.f32.gmra.mxu0 %v387
    %v409 = vpop.f32.mrf.mxu0
    %v410 = vadd.f32 0.0, %v409
    %411 = vdwg.mxu0
    %414 = vrot.lane.b32.xlu0 %v280, 64
    %v415 = vpop.permute.xlu0 %414
    %416 = vrot.lane.b32.xlu0 %v281, 64
    %v417 = vpop.permute.xlu0 %416
    %v421 = vsel %vm228, %v261, 0
    %v424 = vsel %vm228, %v276, 0
    %426 = vmatpush.msra.mxu0 0.0
    %427 = vmatpush.msra.mxu0 0.0
    %428 = vmatpush.msra.mxu0 0.0
    %429 = vmatpush.msra.mxu0 0.0
    %430 = vmatpush.msra.mxu0 0.0
    %431 = vmatpush.msra.mxu0 0.0
    %432 = vmatpush.msra.mxu0 0.0
    %433 = vmatpush.msra.mxu0 0.0
    %434 = vmatpush.msra.mxu0 0.0
    %435 = vmatpush.msra.mxu0 0.0
    %436 = vmatpush.msra.mxu0 0.0
    %437 = vmatpush.msra.mxu0 0.0
    %438 = vmatpush.msra.mxu0 0.0
    %439 = vmatpush.msra.mxu0 0.0
    %440 = vmatpush.msra.mxu0 %v417
    %441 = vmatpush.msra.mxu0 %v415
    %442 = vmatmul.f32.gmra.mxu0 %v421
    %v443 = vpop.f32.mrf.mxu0
    %v444 = vadd.f32 %v407, %v443
    %445 = vmatmul.f32.gmra.mxu0 %v424
    %v446 = vpop.f32.mrf.mxu0
    %v447 = vadd.f32 %v410, %v446
    %448 = vdwg.mxu0
    %s449 = scalar_lea.vmem %s2, 2
    %v450 = vld [vmem:[%s449] sm:$0x1]
    %v452 = vperm.slane %v450, 0
    %v454 = vmul.f32 %v175, %v452
    %v455 = vmul.f32 %v177, %v452
    %v457 = vsel %vm77, %v454, 0
    %v460 = vsel %vm77, %v455, 0
    %462 = vmatpush.xpose.msra.mxu0 0.0
    %463 = vmatpush.xpose.msra.mxu0 0.0
    %464 = vmatpush.xpose.msra.mxu0 0.0
    %465 = vmatpush.xpose.msra.mxu0 0.0
    %466 = vmatpush.xpose.msra.mxu0 0.0
    %467 = vmatpush.xpose.msra.mxu0 0.0
    %468 = vmatpush.xpose.msra.mxu0 0.0
    %469 = vmatpush.xpose.msra.mxu0 0.0
    %470 = vmatpush.xpose.msra.mxu0 0.0
    %471 = vmatpush.xpose.msra.mxu0 0.0
    %472 = vmatpush.xpose.msra.mxu0 0.0
    %473 = vmatpush.xpose.msra.mxu0 0.0
    %474 = vmatpush.xpose.msra.mxu0 0.0
    %475 = vmatpush.xpose.msra.mxu0 0.0
    %476 = vmatpush.xpose.msra.mxu0 %v199
    %477 = vmatpush.xpose.msra.mxu0 %v197
    %478 = vmatmul.f32.gmra.mxu0 %v457
    %v479 = vpop.f32.mrf.mxu0
    %v480 = vadd.f32 0.0, %v479
    %481 = vmatmul.f32.gmra.mxu0 %v460
    %v482 = vpop.f32.mrf.mxu0
    %v483 = vadd.f32 0.0, %v482
    %484 = vdwg.mxu0
    %v485 = vmul.f32 %v480, 0.35355338
    %v486 = vmul.f32 %v483, 0.35355338
    %v487 = vadd.f32 %v485, %v139
    %v488 = vadd.f32 %v486, %v140
    %v489 = vsel %vm228, %v487, -inf
    %490 = vmax.xlane.f32.xlu0 %v489
    %v491 = vpop.xlane.xlu0 %490
    %v492 = vsel %vm228, %v488, -inf
    %493 = vmax.xlane.f32.xlu0 %v492
    %v494 = vpop.xlane.xlu0 %493
    %v495 = vsub.f32 %v487, %v491
    %v496 = vsub.f32 %v488, %v494
    %v497 = vmul.f32 %v495, 1.442695
    %v498 = vpow.pop %v497
    %v499 = vmul.f32 %v496, 1.442695
    %v500 = vpow.pop %v499
    %v501 = vsel %vm228, %v498, 0.0
    %502 = vadd.xlane.f32.xlu0 %v501
    %v503 = vpop.xlane.xlu0 %502
    %v504 = vsel %vm228, %v500, 0.0
    %505 = vadd.xlane.f32.xlu0 %v504
    %v506 = vpop.xlane.xlu0 %505
    %v507 = vrcp.pop %v503
    %v508 = vmul.f32 %v503, %v507
    %v509 = vsub.f32 1.0, %v508
    %v510 = vmul.f32 %v507, %v509
    %v511 = vadd.f32 %v507, %v510
    %vm512 = vweird.f32 %v503
    %vm513 = vweird.f32 %v507
    %vm514 = vmor %vm512, %vm513
    %v515 = vsel %vm514, %v507, %v511
    %v516 = vand.u32 2147483647, %v503
    %vm517 = vcmp.eq.f32.partialorder %v516, 8.507059e+37
    %v518 = vand.u32 %v503, 2147483648
    %v519 = vor.u32 1.1754944e-38, %v518
    %v520 = vsel %vm517, %v519, %v515
    %v521 = vmul.f32 %v498, %v520
    %v522 = vrcp.pop %v506
    %v523 = vmul.f32 %v506, %v522
    %v524 = vsub.f32 1.0, %v523
    %v525 = vmul.f32 %v522, %v524
    %v526 = vadd.f32 %v522, %v525
    %vm527 = vweird.f32 %v506
    %vm528 = vweird.f32 %v522
    %vm529 = vmor %vm527, %vm528
    %v530 = vsel %vm529, %v522, %v526
    %v531 = vand.u32 2147483647, %v506
    %vm532 = vcmp.eq.f32.partialorder %v531, 8.507059e+37
    %v533 = vand.u32 %v506, 2147483648
    %v534 = vor.u32 1.1754944e-38, %v533
    %v535 = vsel %vm532, %v534, %v530
    %v536 = vmul.f32 %v500, %v535
    %537 = vrot.lane.b32.xlu0 %v452, 64
    %v538 = vpop.permute.xlu0 %537
    %v540 = vmul.f32 %v175, %v538
    %v541 = vmul.f32 %v177, %v538
    %544 = vrot.lane.b32.xlu0 %v540, 64
    %v545 = vpop.permute.xlu0 %544
    %546 = vrot.lane.b32.xlu0 %v541, 64
    %v547 = vpop.permute.xlu0 %546
    %v551 = vsel %vm228, %v521, 0
    %v554 = vsel %vm228, %v536, 0
    %556 = vmatpush.msra.mxu0 0.0
    %557 = vmatpush.msra.mxu0 0.0
    %558 = vmatpush.msra.mxu0 0.0
    %559 = vmatpush.msra.mxu0 0.0
    %560 = vmatpush.msra.mxu0 0.0
    %561 = vmatpush.msra.mxu0 0.0
    %562 = vmatpush.msra.mxu0 0.0
    %563 = vmatpush.msra.mxu0 0.0
    %564 = vmatpush.msra.mxu0 0.0
    %565 = vmatpush.msra.mxu0 0.0
    %566 = vmatpush.msra.mxu0 0.0
    %567 = vmatpush.msra.mxu0 0.0
    %568 = vmatpush.msra.mxu0 0.0
    %569 = vmatpush.msra.mxu0 0.0
    %570 = vmatpush.msra.mxu0 %v547
    %571 = vmatpush.msra.mxu0 %v545
    %572 = vmatmul.f32.gmra.mxu0 %v551
    %v573 = vpop.f32.mrf.mxu0
    %v574 = vadd.f32 0.0, %v573
    %575 = vmatmul.f32.gmra.mxu0 %v554
    %v576 = vpop.f32.mrf.mxu0
    %v577 = vadd.f32 0.0, %v576
    %578 = vdwg.mxu0
    %v579 = vadd.f32 %v444, %v574
    %v580 = vadd.f32 %v447, %v577
    %s581 = scalar_lea.vmem %s2, 3
    %v582 = vld [vmem:[%s581] sm:$0x1]
    %v584 = vperm.slane %v582, 0
    %v586 = vmul.f32 %v175, %v584
    %v587 = vmul.f32 %v177, %v584
    %v589 = vsel %vm77, %v586, 0
    %v592 = vsel %vm77, %v587, 0
    %594 = vmatpush.xpose.msra.mxu0 0.0
    %595 = vmatpush.xpose.msra.mxu0 0.0
    %596 = vmatpush.xpose.msra.mxu0 0.0
    %597 = vmatpush.xpose.msra.mxu0 0.0
    %598 = vmatpush.xpose.msra.mxu0 0.0
    %599 = vmatpush.xpose.msra.mxu0 0.0
    %600 = vmatpush.xpose.msra.mxu0 0.0
    %601 = vmatpush.xpose.msra.mxu0 0.0
    %602 = vmatpush.xpose.msra.mxu0 0.0
    %603 = vmatpush.xpose.msra.mxu0 0.0
    %604 = vmatpush.xpose.msra.mxu0 0.0
    %605 = vmatpush.xpose.msra.mxu0 0.0
    %606 = vmatpush.xpose.msra.mxu0 0.0
    %607 = vmatpush.xpose.msra.mxu0 0.0
    %608 = vmatpush.xpose.msra.mxu0 %v199
    %609 = vmatpush.xpose.msra.mxu0 %v197
    %610 = vmatmul.f32.gmra.mxu0 %v589
    %v611 = vpop.f32.mrf.mxu0
    %v612 = vadd.f32 0.0, %v611
    %613 = vmatmul.f32.gmra.mxu0 %v592
    %v614 = vpop.f32.mrf.mxu0
    %v615 = vadd.f32 0.0, %v614
    %616 = vdwg.mxu0
    %v617 = vmul.f32 %v612, 0.35355338
    %v618 = vmul.f32 %v615, 0.35355338
    %v619 = vadd.f32 %v617, %v139
    %v620 = vadd.f32 %v618, %v140
    %v621 = vsel %vm228, %v619, -inf
    %622 = vmax.xlane.f32.xlu0 %v621
    %v623 = vpop.xlane.xlu0 %622
    %v624 = vsel %vm228, %v620, -inf
    %625 = vmax.xlane.f32.xlu0 %v624
    %v626 = vpop.xlane.xlu0 %625
    %v627 = vsub.f32 %v619, %v623
    %v628 = vsub.f32 %v620, %v626
    %v629 = vmul.f32 %v627, 1.442695
    %v630 = vpow.pop %v629
    %v631 = vmul.f32 %v628, 1.442695
    %v632 = vpow.pop %v631
    %v633 = vsel %vm228, %v630, 0.0
    %634 = vadd.xlane.f32.xlu0 %v633
    %v635 = vpop.xlane.xlu0 %634
    %v636 = vsel %vm228, %v632, 0.0
    %637 = vadd.xlane.f32.xlu0 %v636
    %v638 = vpop.xlane.xlu0 %637
    %v639 = vrcp.pop %v635
    %v640 = vmul.f32 %v635, %v639
    %v641 = vsub.f32 1.0, %v640
    %v642 = vmul.f32 %v639, %v641
    %v643 = vadd.f32 %v639, %v642
    %vm644 = vweird.f32 %v635
    %vm645 = vweird.f32 %v639
    %vm646 = vmor %vm644, %vm645
    %v647 = vsel %vm646, %v639, %v643
    %v648 = vand.u32 2147483647, %v635
    %vm649 = vcmp.eq.f32.partialorder %v648, 8.507059e+37
    %v650 = vand.u32 %v635, 2147483648
    %v651 = vor.u32 1.1754944e-38, %v650
    %v652 = vsel %vm649, %v651, %v647
    %v653 = vmul.f32 %v630, %v652
    %v654 = vrcp.pop %v638
    %v655 = vmul.f32 %v638, %v654
    %v656 = vsub.f32 1.0, %v655
    %v657 = vmul.f32 %v654, %v656
    %v658 = vadd.f32 %v654, %v657
    %vm659 = vweird.f32 %v638
    %vm660 = vweird.f32 %v654
    %vm661 = vmor %vm659, %vm660
    %v662 = vsel %vm661, %v654, %v658
    %v663 = vand.u32 2147483647, %v638
    %vm664 = vcmp.eq.f32.partialorder %v663, 8.507059e+37
    %v665 = vand.u32 %v638, 2147483648
    %v666 = vor.u32 1.1754944e-38, %v665
    %v667 = vsel %vm664, %v666, %v662
    %v668 = vmul.f32 %v632, %v667
    %669 = vrot.lane.b32.xlu0 %v584, 64
    %v670 = vpop.permute.xlu0 %669
    %v672 = vmul.f32 %v175, %v670
    %v673 = vmul.f32 %v177, %v670
    %676 = vrot.lane.b32.xlu0 %v672, 64
    %v677 = vpop.permute.xlu0 %676
    %678 = vrot.lane.b32.xlu0 %v673, 64
    %v679 = vpop.permute.xlu0 %678
    %v683 = vsel %vm228, %v653, 0
    %v686 = vsel %vm228, %v668, 0
    %688 = vmatpush.msra.mxu0 0.0
    %689 = vmatpush.msra.mxu0 0.0
    %690 = vmatpush.msra.mxu0 0.0
    %691 = vmatpush.msra.mxu0 0.0
    %692 = vmatpush.msra.mxu0 0.0
    %693 = vmatpush.msra.mxu0 0.0
    %694 = vmatpush.msra.mxu0 0.0
    %695 = vmatpush.msra.mxu0 0.0
    %696 = vmatpush.msra.mxu0 0.0
    %697 = vmatpush.msra.mxu0 0.0
    %698 = vmatpush.msra.mxu0 0.0
    %699 = vmatpush.msra.mxu0 0.0
    %700 = vmatpush.msra.mxu0 0.0
    %701 = vmatpush.msra.mxu0 0.0
    %702 = vmatpush.msra.mxu0 %v679
    %703 = vmatpush.msra.mxu0 %v677
    %704 = vmatmul.f32.gmra.mxu0 %v683
    %v705 = vpop.f32.mrf.mxu0
    %v706 = vadd.f32 0.0, %v705
    %707 = vmatmul.f32.gmra.mxu0 %v686
    %v708 = vpop.f32.mrf.mxu0
    %v709 = vadd.f32 0.0, %v708
    %710 = vdwg.mxu0
    %v711 = vadd.f32 %v579, %v706
    %v712 = vadd.f32 %v580, %v709
    %v713 = vld [vmem:[%s8] sm:$0xf]
    %v714 = vld [vmem:[%s8 + $0x4] sm:$0xf]
    %v715 = vld [vmem:[%s8 + $0x8] sm:$0xf]
    %v716 = vld [vmem:[%s8 + $0xc] sm:$0xf]
    %v717 = vld [vmem:[%s9] sm:$0x1]
    %v718 = vpack.c.bf16 %v712, %v711
    %v720 = vperm.slane %v717, 0
    %v726 = vunpack.c.l.b16 %v713
    %v727 = vunpack.c.l.b16 %v714
    %v728 = vunpack.c.l.b16 %v715
    %v729 = vunpack.c.l.b16 %v716
    %v730 = vpack.c.b16 %v727, %v726
    %v731 = vpack.c.b16 %v729, %v728
    %v735 = vsel %vm77, %v718, 0
    %737 = vmatpush.bf16.msra.mxu0 0
    %738 = vmatpush.bf16.msra.mxu0 0
    %739 = vmatpush.bf16.msra.mxu0 0
    %740 = vmatpush.bf16.msra.mxu0 0
    %741 = vmatpush.bf16.msra.mxu0 0
    %742 = vmatpush.bf16.msra.mxu0 0
    %743 = vmatpush.bf16.msra.mxu0 %v731
    %744 = vmatpush.bf16.msra.mxu0 %v730
    %745 = vmatmul.bf16.gmra.mxu0 %v735
    %v746 = vpop.f32.mrf.mxu0
    %v747 = vadd.f32 %v720, %v746
    %v748 = vpop.f32.mrf.mxu0
    %v749 = vadd.f32 %v720, %v748
    %750 = vdwg.mxu0
    %v751 = vadd.f32 %v747, %v137
    %v752 = vadd.f32 %v749, %v138
    %v753 = vld [vmem:[%s10] sm:$0x1]
    %v754 = vld [vmem:[%s11] sm:$0x1]
    %v755 = vsel %vm77, %v751, 0.0
    %756 = vadd.xlane.f32.xlu0 %v755
    %v757 = vpop.xlane.xlu0 %756
    %v758 = vsel %vm77, %v752, 0.0
    %759 = vadd.xlane.f32.xlu0 %v758
    %v760 = vpop.xlane.xlu0 %759
    %v761 = vmul.f32 %v757, %v90
    %v762 = vmul.f32 %v760, %v90
    %v763 = vsub.f32 %v751, %v761
    %v764 = vsub.f32 %v752, %v762
    %v765 = vmul.f32 %v763, %v763
    %v766 = vmul.f32 %v764, %v764
    %v767 = vsel %vm77, %v765, 0.0
    %768 = vadd.xlane.f32.xlu0 %v767
    %v769 = vpop.xlane.xlu0 %768
    %v770 = vsel %vm77, %v766, 0.0
    %771 = vadd.xlane.f32.xlu0 %v770
    %v772 = vpop.xlane.xlu0 %771
    %v773 = vmul.f32 %v769, %v90
    %v774 = vmul.f32 %v772, %v90
    %v775 = vadd.f32 %v773, 1e-12
    %v776 = vadd.f32 %v774, 1e-12
    %v777 = vrsqrt.pop %v775
    %v778 = vmul.f32 %v777, %v775
    %v779 = vmul.f32 %v778, %v777
    %v780 = vmul.f32 0.5, %v779
    %v781 = vsub.f32 1.5, %v780
    %v782 = vmul.f32 %v777, %v781
    %vm783 = vweird.f32 %v775
    %vm784 = vweird.f32 %v777
    %vm785 = vmor %vm783, %vm784
    %v786 = vsel %vm785, %v777, %v782
    %v787 = vrsqrt.pop %v776
    %v788 = vmul.f32 %v787, %v776
    %v789 = vmul.f32 %v788, %v787
    %v790 = vmul.f32 0.5, %v789
    %v791 = vsub.f32 1.5, %v790
    %v792 = vmul.f32 %v787, %v791
    %vm793 = vweird.f32 %v776
    %vm794 = vweird.f32 %v787
    %vm795 = vmor %vm793, %vm794
    %v796 = vsel %vm795, %v787, %v792
    %v797 = vmul.f32 %v763, %v786
    %v798 = vmul.f32 %v764, %v796
    %v800 = vperm.slane %v753, 0
    %v802 = vmul.f32 %v797, %v800
    %v803 = vmul.f32 %v798, %v800
    %v805 = vperm.slane %v754, 0
    %v807 = vadd.f32 %v802, %v805
    %v808 = vadd.f32 %v803, %v805
    %v809 = vld [vmem:[%s12] sm:$0xf]
    %v810 = vld [vmem:[%s12 + $0x4] sm:$0xf]
    %v811 = vld [vmem:[%s12 + $0x8] sm:$0xf]
    %v812 = vld [vmem:[%s12 + $0xc] sm:$0xf]
    %v813 = vld [vmem:[%s13] sm:$0x1]
    %v814 = vpack.c.bf16 %v808, %v807
    %v816 = vperm.slane %v813, 0
    %v822 = vunpack.c.l.b16 %v809
    %v823 = vunpack.c.l.b16 %v810
    %v824 = vunpack.c.l.b16 %v811
    %v825 = vunpack.c.l.b16 %v812
    %v826 = vpack.c.b16 %v823, %v822
    %v827 = vpack.c.b16 %v825, %v824
    %v831 = vsel %vm77, %v814, 0
    %833 = vmatpush.bf16.msra.mxu0 0
    %834 = vmatpush.bf16.msra.mxu0 0
    %835 = vmatpush.bf16.msra.mxu0 0
    %836 = vmatpush.bf16.msra.mxu0 0
    %837 = vmatpush.bf16.msra.mxu0 0
    %838 = vmatpush.bf16.msra.mxu0 0
    %839 = vmatpush.bf16.msra.mxu0 %v827
    %840 = vmatpush.bf16.msra.mxu0 %v826
    %841 = vmatmul.bf16.gmra.mxu0 %v831
    %v842 = vpop.f32.mrf.mxu0
    %v843 = vadd.f32 %v816, %v842
    %v844 = vpop.f32.mrf.mxu0
    %v845 = vadd.f32 %v816, %v844
    %846 = vdwg.mxu0
    %v847 = vmul.f32 %v843, 0.5
    %v848 = vmul.f32 %v845, 0.5
    %v849 = vmul.f32 %v843, 0.044715
    %v850 = vmul.f32 %v845, 0.044715
    %v851 = vmul.f32 %v849, %v843
    %v852 = vmul.f32 %v850, %v845
    %v853 = vmul.f32 %v851, %v843
    %v854 = vmul.f32 %v852, %v845
    %v855 = vadd.f32 %v843, %v853
    %v856 = vadd.f32 %v845, %v854
    %v857 = vmul.f32 %v855, 0.7978846
    %v858 = vmul.f32 %v856, 0.7978846
    %v859 = vtanh.pop %v857
    %v860 = vtanh.pop %v858
    %v861 = vadd.f32 %v859, 1.0
    %v862 = vadd.f32 %v860, 1.0
    %v863 = vmul.f32 %v847, %v861
    %v864 = vmul.f32 %v848, %v862
    %v865 = vld [vmem:[%s14] sm:$0xf]
    %v866 = vld [vmem:[%s14 + $0x4] sm:$0xf]
    %v867 = vld [vmem:[%s14 + $0x8] sm:$0xf]
    %v868 = vld [vmem:[%s14 + $0xc] sm:$0xf]
    %v869 = vld [vmem:[%s14 + $0x10] sm:$0xf]
    %v870 = vld [vmem:[%s14 + $0x14] sm:$0xf]
    %v871 = vld [vmem:[%s14 + $0x18] sm:$0xf]
    %v872 = vld [vmem:[%s14 + $0x1c] sm:$0xf]
    %v873 = vld [vmem:[%s15] sm:$0x1]
    %v874 = vpack.c.bf16 %v864, %v863
    %v876 = vperm.slane %v873, 0
    %v886 = vunpack.c.l.b16 %v865
    %v887 = vunpack.c.l.b16 %v866
    %v888 = vunpack.c.l.b16 %v867
    %v889 = vunpack.c.l.b16 %v868
    %v890 = vunpack.c.l.b16 %v869
    %v891 = vunpack.c.l.b16 %v870
    %v892 = vunpack.c.l.b16 %v871
    %v893 = vunpack.c.l.b16 %v872
    %v894 = vpack.c.b16 %v887, %v886
    %v895 = vpack.c.b16 %v889, %v888
    %v896 = vpack.c.b16 %v891, %v890
    %v897 = vpack.c.b16 %v893, %v892
    %vm902 = vcmask 523264
    %v904 = vsel %vm902, %v874, 0
    %906 = vmatpush.bf16.msra.mxu0 0
    %907 = vmatpush.bf16.msra.mxu0 0
    %908 = vmatpush.bf16.msra.mxu0 0
    %909 = vmatpush.bf16.msra.mxu0 0
    %910 = vmatpush.bf16.msra.mxu0 %v897
    %911 = vmatpush.bf16.msra.mxu0 %v896
    %912 = vmatpush.bf16.msra.mxu0 %v895
    %913 = vmatpush.bf16.msra.mxu0 %v894
    %914 = vmatmul.bf16.gmra.mxu0 %v904
    %v915 = vpop.f32.mrf.mxu0
    %v916 = vadd.f32 %v876, %v915
    %v917 = vpop.f32.mrf.mxu0
    %v918 = vadd.f32 %v876, %v917
    %919 = vdwg.mxu0
    %v920 = vadd.f32 %v916, %v807
    %v921 = vadd.f32 %v918, %v808
    %v922 = vld [vmem:[%s16] sm:$0x1]
    %v923 = vld [vmem:[%s17] sm:$0x1]
    %v924 = vsel %vm77, %v920, 0.0
    %925 = vadd.xlane.f32.xlu0 %v924
    %v926 = vpop.xlane.xlu0 %925
    %v927 = vsel %vm77, %v921, 0.0
    %928 = vadd.xlane.f32.xlu0 %v927
    %v929 = vpop.xlane.xlu0 %928
    %v930 = vmul.f32 %v926, %v90
    %v931 = vmul.f32 %v929, %v90
    %v932 = vsub.f32 %v920, %v930
    %v933 = vsub.f32 %v921, %v931
    %v934 = vmul.f32 %v932, %v932
    %v935 = vmul.f32 %v933, %v933
    %v936 = vsel %vm77, %v934, 0.0
    %937 = vadd.xlane.f32.xlu0 %v936
    %v938 = vpop.xlane.xlu0 %937
    %v939 = vsel %vm77, %v935, 0.0
    %940 = vadd.xlane.f32.xlu0 %v939
    %v941 = vpop.xlane.xlu0 %940
    %v942 = vmul.f32 %v938, %v90
    %v943 = vmul.f32 %v941, %v90
    %v944 = vadd.f32 %v942, 1e-12
    %v945 = vadd.f32 %v943, 1e-12
    %v946 = vrsqrt.pop %v944
    %v947 = vmul.f32 %v946, %v944
    %v948 = vmul.f32 %v947, %v946
    %v949 = vmul.f32 0.5, %v948
    %v950 = vsub.f32 1.5, %v949
    %v951 = vmul.f32 %v946, %v950
    %vm952 = vweird.f32 %v944
    %vm953 = vweird.f32 %v946
    %vm954 = vmor %vm952, %vm953
    %v955 = vsel %vm954, %v946, %v951
    %v956 = vrsqrt.pop %v945
    %v957 = vmul.f32 %v956, %v945
    %v958 = vmul.f32 %v957, %v956
    %v959 = vmul.f32 0.5, %v958
    %v960 = vsub.f32 1.5, %v959
    %v961 = vmul.f32 %v956, %v960
    %vm962 = vweird.f32 %v945
    %vm963 = vweird.f32 %v956
    %vm964 = vmor %vm962, %vm963
    %v965 = vsel %vm964, %v956, %v961
    %v966 = vmul.f32 %v932, %v955
    %v967 = vmul.f32 %v933, %v965
    %v969 = vperm.slane %v922, 0
    %v971 = vmul.f32 %v966, %v969
    %v972 = vmul.f32 %v967, %v969
    %v974 = vperm.slane %v923, 0
    %v976 = vadd.f32 %v971, %v974
    %v977 = vadd.f32 %v972, %v974
    %s978 = scalar_lea.vmem %s6, 16
    %v979 = vld [vmem:[%s978] sm:$0xf]
    %v980 = vld [vmem:[%s978 + $0x4] sm:$0xf]
    %v981 = vld [vmem:[%s978 + $0x8] sm:$0xf]
    %v982 = vld [vmem:[%s978 + $0xc] sm:$0xf]
    %s983 = scalar_lea.vmem %s7, 1
    %v984 = vld [vmem:[%s983] sm:$0x1]
    %v985 = vpack.c.bf16 %v977, %v976
    %v987 = vperm.slane %v984, 0
    %v993 = vunpack.c.l.b16 %v979
    %v994 = vunpack.c.l.b16 %v980
    %v995 = vunpack.c.l.b16 %v981
    %v996 = vunpack.c.l.b16 %v982
    %v997 = vpack.c.b16 %v994, %v993
    %v998 = vpack.c.b16 %v996, %v995
    %v1002 = vsel %vm77, %v985, 0
    %1004 = vmatpush.bf16.msra.mxu0 0
    %1005 = vmatpush.bf16.msra.mxu0 0
    %1006 = vmatpush.bf16.msra.mxu0 0
    %1007 = vmatpush.bf16.msra.mxu0 0
    %1008 = vmatpush.bf16.msra.mxu0 0
    %1009 = vmatpush.bf16.msra.mxu0 0
    %1010 = vmatpush.bf16.msra.mxu0 %v998
    %1011 = vmatpush.bf16.msra.mxu0 %v997
    %1012 = vmatmul.bf16.gmra.mxu0 %v1002
    %v1013 = vpop.f32.mrf.mxu0
    %v1014 = vadd.f32 %v987, %v1013
    %v1015 = vpop.f32.mrf.mxu0
    %v1016 = vadd.f32 %v987, %v1015
    %1017 = vdwg.mxu0
    %v1018 = vmul.f32 %v1014, %v181
    %v1019 = vmul.f32 %v1016, %v181
    %1022 = vrot.lane.b32.xlu0 %v1014, 96
    %v1023 = vpop.permute.xlu0 %1022
    %1024 = vrot.lane.b32.xlu0 %v1016, 96
    %v1025 = vpop.permute.xlu0 %1024
    %v1027 = vsel %vm77, %v1018, 0
    %v1030 = vsel %vm77, %v1019, 0
    %v1032 = vsel %vm77, %v1023, 0
    %v1034 = vsel %vm77, %v1025, 0
    %1036 = vmatpush.xpose.msra.mxu0 0.0
    %1037 = vmatpush.xpose.msra.mxu0 0.0
    %1038 = vmatpush.xpose.msra.mxu0 0.0
    %1039 = vmatpush.xpose.msra.mxu0 0.0
    %1040 = vmatpush.xpose.msra.mxu0 0.0
    %1041 = vmatpush.xpose.msra.mxu0 0.0
    %1042 = vmatpush.xpose.msra.mxu0 0.0
    %1043 = vmatpush.xpose.msra.mxu0 0.0
    %1044 = vmatpush.xpose.msra.mxu0 0.0
    %1045 = vmatpush.xpose.msra.mxu0 0.0
    %1046 = vmatpush.xpose.msra.mxu0 0.0
    %1047 = vmatpush.xpose.msra.mxu0 0.0
    %1048 = vmatpush.xpose.msra.mxu0 0.0
    %1049 = vmatpush.xpose.msra.mxu0 0.0
    %1050 = vmatpush.xpose.msra.mxu0 %v1034
    %1051 = vmatpush.xpose.msra.mxu0 %v1032
    %1052 = vmatmul.f32.gmra.mxu0 %v1027
    %v1053 = vpop.f32.mrf.mxu0
    %v1054 = vadd.f32 0.0, %v1053
    %1055 = vmatmul.f32.gmra.mxu0 %v1030
    %v1056 = vpop.f32.mrf.mxu0
    %v1057 = vadd.f32 0.0, %v1056
    %1058 = vdwg.mxu0
    %v1059 = vmul.f32 %v1054, 0.35355338
    %v1060 = vmul.f32 %v1057, 0.35355338
    %v1061 = vadd.f32 %v1059, %v139
    %v1062 = vadd.f32 %v1060, %v140
    %v1063 = vsel %vm228, %v1061, -inf
    %1064 = vmax.xlane.f32.xlu0 %v1063
    %v1065 = vpop.xlane.xlu0 %1064
    %v1066 = vsel %vm228, %v1062, -inf
    %1067 = vmax.xlane.f32.xlu0 %v1066
    %v1068 = vpop.xlane.xlu0 %1067
    %v1069 = vsub.f32 %v1061, %v1065
    %v1070 = vsub.f32 %v1062, %v1068
    %v1071 = vmul.f32 %v1069, 1.442695
    %v1072 = vpow.pop %v1071
    %v1073 = vmul.f32 %v1070, 1.442695
    %v1074 = vpow.pop %v1073
    %v1075 = vsel %vm228, %v1072, 0.0
    %1076 = vadd.xlane.f32.xlu0 %v1075
    %v1077 = vpop.xlane.xlu0 %1076
    %v1078 = vsel %vm228, %v1074, 0.0
    %1079 = vadd.xlane.f32.xlu0 %v1078
    %v1080 = vpop.xlane.xlu0 %1079
    %v1081 = vrcp.pop %v1077
    %v1082 = vmul.f32 %v1077, %v1081
    %v1083 = vsub.f32 1.0, %v1082
    %v1084 = vmul.f32 %v1081, %v1083
    %v1085 = vadd.f32 %v1081, %v1084
    %vm1086 = vweird.f32 %v1077
    %vm1087 = vweird.f32 %v1081
    %vm1088 = vmor %vm1086, %vm1087
    %v1089 = vsel %vm1088, %v1081, %v1085
    %v1090 = vand.u32 2147483647, %v1077
    %vm1091 = vcmp.eq.f32.partialorder %v1090, 8.507059e+37
    %v1092 = vand.u32 %v1077, 2147483648
    %v1093 = vor.u32 1.1754944e-38, %v1092
    %v1094 = vsel %vm1091, %v1093, %v1089
    %v1095 = vmul.f32 %v1072, %v1094
    %v1096 = vrcp.pop %v1080
    %v1097 = vmul.f32 %v1080, %v1096
    %v1098 = vsub.f32 1.0, %v1097
    %v1099 = vmul.f32 %v1096, %v1098
    %v1100 = vadd.f32 %v1096, %v1099
    %vm1101 = vweird.f32 %v1080
    %vm1102 = vweird.f32 %v1096
    %vm1103 = vmor %vm1101, %vm1102
    %v1104 = vsel %vm1103, %v1096, %v1100
    %v1105 = vand.u32 2147483647, %v1080
    %vm1106 = vcmp.eq.f32.partialorder %v1105, 8.507059e+37
    %v1107 = vand.u32 %v1080, 2147483648
    %v1108 = vor.u32 1.1754944e-38, %v1107
    %v1109 = vsel %vm1106, %v1108, %v1104
    %v1110 = vmul.f32 %v1074, %v1109
    %v1111 = vmul.f32 %v1014, %v278
    %v1112 = vmul.f32 %v1016, %v278
    %v1113 = vmul.f32 %v1014, %v285
    %v1114 = vmul.f32 %v1016, %v285
    %v1116 = vsel %vm77, %v1113, 0
    %v1119 = vsel %vm77, %v1114, 0
    %1121 = vmatpush.xpose.msra.mxu0 0.0
    %1122 = vmatpush.xpose.msra.mxu0 0.0
    %1123 = vmatpush.xpose.msra.mxu0 0.0
    %1124 = vmatpush.xpose.msra.mxu0 0.0
    %1125 = vmatpush.xpose.msra.mxu0 0.0
    %1126 = vmatpush.xpose.msra.mxu0 0.0
    %1127 = vmatpush.xpose.msra.mxu0 0.0
    %1128 = vmatpush.xpose.msra.mxu0 0.0
    %1129 = vmatpush.xpose.msra.mxu0 0.0
    %1130 = vmatpush.xpose.msra.mxu0 0.0
    %1131 = vmatpush.xpose.msra.mxu0 0.0
    %1132 = vmatpush.xpose.msra.mxu0 0.0
    %1133 = vmatpush.xpose.msra.mxu0 0.0
    %1134 = vmatpush.xpose.msra.mxu0 0.0
    %1135 = vmatpush.xpose.msra.mxu0 %v1034
    %1136 = vmatpush.xpose.msra.mxu0 %v1032
    %1137 = vmatmul.f32.gmra.mxu0 %v1116
    %v1138 = vpop.f32.mrf.mxu0
    %v1139 = vadd.f32 0.0, %v1138
    %1140 = vmatmul.f32.gmra.mxu0 %v1119
    %v1141 = vpop.f32.mrf.mxu0
    %v1142 = vadd.f32 0.0, %v1141
    %1143 = vdwg.mxu0
    %v1144 = vmul.f32 %v1139, 0.35355338
    %v1145 = vmul.f32 %v1142, 0.35355338
    %v1146 = vadd.f32 %v1144, %v139
    %v1147 = vadd.f32 %v1145, %v140
    %v1148 = vsel %vm228, %v1146, -inf
    %1149 = vmax.xlane.f32.xlu0 %v1148
    %v1150 = vpop.xlane.xlu0 %1149
    %v1151 = vsel %vm228, %v1147, -inf
    %1152 = vmax.xlane.f32.xlu0 %v1151
    %v1153 = vpop.xlane.xlu0 %1152
    %v1154 = vsub.f32 %v1146, %v1150
    %v1155 = vsub.f32 %v1147, %v1153
    %v1156 = vmul.f32 %v1154, 1.442695
    %v1157 = vpow.pop %v1156
    %v1158 = vmul.f32 %v1155, 1.442695
    %v1159 = vpow.pop %v1158
    %v1160 = vsel %vm228, %v1157, 0.0
    %1161 = vadd.xlane.f32.xlu0 %v1160
    %v1162 = vpop.xlane.xlu0 %1161
    %v1163 = vsel %vm228, %v1159, 0.0
    %1164 = vadd.xlane.f32.xlu0 %v1163
    %v1165 = vpop.xlane.xlu0 %1164
    %v1166 = vrcp.pop %v1162
    %v1167 = vmul.f32 %v1162, %v1166
    %v1168 = vsub.f32 1.0, %v1167
    %v1169 = vmul.f32 %v1166, %v1168
    %v1170 = vadd.f32 %v1166, %v1169
    %vm1171 = vweird.f32 %v1162
    %vm1172 = vweird.f32 %v1166
    %vm1173 = vmor %vm1171, %vm1172
    %v1174 = vsel %vm1173, %v1166, %v1170
    %v1175 = vand.u32 2147483647, %v1162
    %vm1176 = vcmp.eq.f32.partialorder %v1175, 8.507059e+37
    %v1177 = vand.u32 %v1162, 2147483648
    %v1178 = vor.u32 1.1754944e-38, %v1177
    %v1179 = vsel %vm1176, %v1178, %v1174
    %v1180 = vmul.f32 %v1157, %v1179
    %v1181 = vrcp.pop %v1165
    %v1182 = vmul.f32 %v1165, %v1181
    %v1183 = vsub.f32 1.0, %v1182
    %v1184 = vmul.f32 %v1181, %v1183
    %v1185 = vadd.f32 %v1181, %v1184
    %vm1186 = vweird.f32 %v1165
    %vm1187 = vweird.f32 %v1181
    %vm1188 = vmor %vm1186, %vm1187
    %v1189 = vsel %vm1188, %v1181, %v1185
    %v1190 = vand.u32 2147483647, %v1165
    %vm1191 = vcmp.eq.f32.partialorder %v1190, 8.507059e+37
    %v1192 = vand.u32 %v1165, 2147483648
    %v1193 = vor.u32 1.1754944e-38, %v1192
    %v1194 = vsel %vm1191, %v1193, %v1189
    %v1195 = vmul.f32 %v1159, %v1194
    %v1196 = vmul.f32 %v1014, %v371
    %v1197 = vmul.f32 %v1016, %v371
    %1200 = vrot.lane.b32.xlu0 %v1196, 64
    %v1201 = vpop.permute.xlu0 %1200
    %1202 = vrot.lane.b32.xlu0 %v1197, 64
    %v1203 = vpop.permute.xlu0 %1202
    %v1207 = vsel %vm228, %v1180, 0
    %v1210 = vsel %vm228, %v1195, 0
    %1212 = vmatpush.msra.mxu0 0.0
    %1213 = vmatpush.msra.mxu0 0.0
    %1214 = vmatpush.msra.mxu0 0.0
    %1215 = vmatpush.msra.mxu0 0.0
    %1216 = vmatpush.msra.mxu0 0.0
    %1217 = vmatpush.msra.mxu0 0.0
    %1218 = vmatpush.msra.mxu0 0.0
    %1219 = vmatpush.msra.mxu0 0.0
    %1220 = vmatpush.msra.mxu0 0.0
    %1221 = vmatpush.msra.mxu0 0.0
    %1222 = vmatpush.msra.mxu0 0.0
    %1223 = vmatpush.msra.mxu0 0.0
    %1224 = vmatpush.msra.mxu0 0.0
    %1225 = vmatpush.msra.mxu0 0.0
    %1226 = vmatpush.msra.mxu0 %v1203
    %1227 = vmatpush.msra.mxu0 %v1201
    %1228 = vmatmul.f32.gmra.mxu0 %v1207
    %v1229 = vpop.f32.mrf.mxu0
    %v1230 = vadd.f32 0.0, %v1229
    %1231 = vmatmul.f32.gmra.mxu0 %v1210
    %v1232 = vpop.f32.mrf.mxu0
    %v1233 = vadd.f32 0.0, %v1232
    %1234 = vdwg.mxu0
    %1237 = vrot.lane.b32.xlu0 %v1111, 64
    %v1238 = vpop.permute.xlu0 %1237
    %1239 = vrot.lane.b32.xlu0 %v1112, 64
    %v1240 = vpop.permute.xlu0 %1239
    %v1244 = vsel %vm228, %v1095, 0
    %v1247 = vsel %vm228, %v1110, 0
    %1249 = vmatpush.msra.mxu0 0.0
    %1250 = vmatpush.msra.mxu0 0.0
    %1251 = vmatpush.msra.mxu0 0.0
    %1252 = vmatpush.msra.mxu0 0.0
    %1253 = vmatpush.msra.mxu0 0.0
    %1254 = vmatpush.msra.mxu0 0.0
    %1255 = vmatpush.msra.mxu0 0.0
    %1256 = vmatpush.msra.mxu0 0.0
    %1257 = vmatpush.msra.mxu0 0.0
    %1258 = vmatpush.msra.mxu0 0.0
    %1259 = vmatpush.msra.mxu0 0.0
    %1260 = vmatpush.msra.mxu0 0.0
    %1261 = vmatpush.msra.mxu0 0.0
    %1262 = vmatpush.msra.mxu0 0.0
    %1263 = vmatpush.msra.mxu0 %v1240
    %1264 = vmatpush.msra.mxu0 %v1238
    %1265 = vmatmul.f32.gmra.mxu0 %v1244
    %v1266 = vpop.f32.mrf.mxu0
    %v1267 = vadd.f32 %v1230, %v1266
    %1268 = vmatmul.f32.gmra.mxu0 %v1247
    %v1269 = vpop.f32.mrf.mxu0
    %v1270 = vadd.f32 %v1233, %v1269
    %1271 = vdwg.mxu0
    %v1272 = vmul.f32 %v1014, %v452
    %v1273 = vmul.f32 %v1016, %v452
    %v1275 = vsel %vm77, %v1272, 0
    %v1278 = vsel %vm77, %v1273, 0
    %1280 = vmatpush.xpose.msra.mxu0 0.0
    %1281 = vmatpush.xpose.msra.mxu0 0.0
    %1282 = vmatpush.xpose.msra.mxu0 0.0
    %1283 = vmatpush.xpose.msra.mxu0 0.0
    %1284 = vmatpush.xpose.msra.mxu0 0.0
    %1285 = vmatpush.xpose.msra.mxu0 0.0
    %1286 = vmatpush.xpose.msra.mxu0 0.0
    %1287 = vmatpush.xpose.msra.mxu0 0.0
    %1288 = vmatpush.xpose.msra.mxu0 0.0
    %1289 = vmatpush.xpose.msra.mxu0 0.0
    %1290 = vmatpush.xpose.msra.mxu0 0.0
    %1291 = vmatpush.xpose.msra.mxu0 0.0
    %1292 = vmatpush.xpose.msra.mxu0 0.0
    %1293 = vmatpush.xpose.msra.mxu0 0.0
    %1294 = vmatpush.xpose.msra.mxu0 %v1034
    %1295 = vmatpush.xpose.msra.mxu0 %v1032
    %1296 = vmatmul.f32.gmra.mxu0 %v1275
    %v1297 = vpop.f32.mrf.mxu0
    %v1298 = vadd.f32 0.0, %v1297
    %1299 = vmatmul.f32.gmra.mxu0 %v1278
    %v1300 = vpop.f32.mrf.mxu0
    %v1301 = vadd.f32 0.0, %v1300
    %1302 = vdwg.mxu0
    %v1303 = vmul.f32 %v1298, 0.35355338
    %v1304 = vmul.f32 %v1301, 0.35355338
    %v1305 = vadd.f32 %v1303, %v139
    %v1306 = vadd.f32 %v1304, %v140
    %v1307 = vsel %vm228, %v1305, -inf
    %1308 = vmax.xlane.f32.xlu0 %v1307
    %v1309 = vpop.xlane.xlu0 %1308
    %v1310 = vsel %vm228, %v1306, -inf
    %1311 = vmax.xlane.f32.xlu0 %v1310
    %v1312 = vpop.xlane.xlu0 %1311
    %v1313 = vsub.f32 %v1305, %v1309
    %v1314 = vsub.f32 %v1306, %v1312
    %v1315 = vmul.f32 %v1313, 1.442695
    %v1316 = vpow.pop %v1315
    %v1317 = vmul.f32 %v1314, 1.442695
    %v1318 = vpow.pop %v1317
    %v1319 = vsel %vm228, %v1316, 0.0
    %1320 = vadd.xlane.f32.xlu0 %v1319
    %v1321 = vpop.xlane.xlu0 %1320
    %v1322 = vsel %vm228, %v1318, 0.0
    %1323 = vadd.xlane.f32.xlu0 %v1322
    %v1324 = vpop.xlane.xlu0 %1323
    %v1325 = vrcp.pop %v1321
    %v1326 = vmul.f32 %v1321, %v1325
    %v1327 = vsub.f32 1.0, %v1326
    %v1328 = vmul.f32 %v1325, %v1327
    %v1329 = vadd.f32 %v1325, %v1328
    %vm1330 = vweird.f32 %v1321
    %vm1331 = vweird.f32 %v1325
    %vm1332 = vmor %vm1330, %vm1331
    %v1333 = vsel %vm1332, %v1325, %v1329
    %v1334 = vand.u32 2147483647, %v1321
    %vm1335 = vcmp.eq.f32.partialorder %v1334, 8.507059e+37
    %v1336 = vand.u32 %v1321, 2147483648
    %v1337 = vor.u32 1.1754944e-38, %v1336
    %v1338 = vsel %vm1335, %v1337, %v1333
    %v1339 = vmul.f32 %v1316, %v1338
    %v1340 = vrcp.pop %v1324
    %v1341 = vmul.f32 %v1324, %v1340
    %v1342 = vsub.f32 1.0, %v1341
    %v1343 = vmul.f32 %v1340, %v1342
    %v1344 = vadd.f32 %v1340, %v1343
    %vm1345 = vweird.f32 %v1324
    %vm1346 = vweird.f32 %v1340
    %vm1347 = vmor %vm1345, %vm1346
    %v1348 = vsel %vm1347, %v1340, %v1344
    %v1349 = vand.u32 2147483647, %v1324
    %vm1350 = vcmp.eq.f32.partialorder %v1349, 8.507059e+37
    %v1351 = vand.u32 %v1324, 2147483648
    %v1352 = vor.u32 1.1754944e-38, %v1351
    %v1353 = vsel %vm1350, %v1352, %v1348
    %v1354 = vmul.f32 %v1318, %v1353
    %v1355 = vmul.f32 %v1014, %v538
    %v1356 = vmul.f32 %v1016, %v538
    %1359 = vrot.lane.b32.xlu0 %v1355, 64
    %v1360 = vpop.permute.xlu0 %1359
    %1361 = vrot.lane.b32.xlu0 %v1356, 64
    %v1362 = vpop.permute.xlu0 %1361
    %v1366 = vsel %vm228, %v1339, 0
    %v1369 = vsel %vm228, %v1354, 0
    %1371 = vmatpush.msra.mxu0 0.0
    %1372 = vmatpush.msra.mxu0 0.0
    %1373 = vmatpush.msra.mxu0 0.0
    %1374 = vmatpush.msra.mxu0 0.0
    %1375 = vmatpush.msra.mxu0 0.0
    %1376 = vmatpush.msra.mxu0 0.0
    %1377 = vmatpush.msra.mxu0 0.0
    %1378 = vmatpush.msra.mxu0 0.0
    %1379 = vmatpush.msra.mxu0 0.0
    %1380 = vmatpush.msra.mxu0 0.0
    %1381 = vmatpush.msra.mxu0 0.0
    %1382 = vmatpush.msra.mxu0 0.0
    %1383 = vmatpush.msra.mxu0 0.0
    %1384 = vmatpush.msra.mxu0 0.0
    %1385 = vmatpush.msra.mxu0 %v1362
    %1386 = vmatpush.msra.mxu0 %v1360
    %1387 = vmatmul.f32.gmra.mxu0 %v1366
    %v1388 = vpop.f32.mrf.mxu0
    %v1389 = vadd.f32 0.0, %v1388
    %1390 = vmatmul.f32.gmra.mxu0 %v1369
    %v1391 = vpop.f32.mrf.mxu0
    %v1392 = vadd.f32 0.0, %v1391
    %1393 = vdwg.mxu0
    %v1394 = vadd.f32 %v1267, %v1389
    %v1395 = vadd.f32 %v1270, %v1392
    %v1396 = vmul.f32 %v1014, %v584
    %v1397 = vmul.f32 %v1016, %v584
    %v1399 = vsel %vm77, %v1396, 0
    %v1402 = vsel %vm77, %v1397, 0
    %1404 = vmatpush.xpose.msra.mxu0 0.0
    %1405 = vmatpush.xpose.msra.mxu0 0.0
    %1406 = vmatpush.xpose.msra.mxu0 0.0
    %1407 = vmatpush.xpose.msra.mxu0 0.0
    %1408 = vmatpush.xpose.msra.mxu0 0.0
    %1409 = vmatpush.xpose.msra.mxu0 0.0
    %1410 = vmatpush.xpose.msra.mxu0 0.0
    %1411 = vmatpush.xpose.msra.mxu0 0.0
    %1412 = vmatpush.xpose.msra.mxu0 0.0
    %1413 = vmatpush.xpose.msra.mxu0 0.0
    %1414 = vmatpush.xpose.msra.mxu0 0.0
    %1415 = vmatpush.xpose.msra.mxu0 0.0
    %1416 = vmatpush.xpose.msra.mxu0 0.0
    %1417 = vmatpush.xpose.msra.mxu0 0.0
    %1418 = vmatpush.xpose.msra.mxu0 %v1034
    %1419 = vmatpush.xpose.msra.mxu0 %v1032
    %1420 = vmatmul.f32.gmra.mxu0 %v1399
    %v1421 = vpop.f32.mrf.mxu0
    %v1422 = vadd.f32 0.0, %v1421
    %1423 = vmatmul.f32.gmra.mxu0 %v1402
    %v1424 = vpop.f32.mrf.mxu0
    %v1425 = vadd.f32 0.0, %v1424
    %1426 = vdwg.mxu0
    %v1427 = vmul.f32 %v1422, 0.35355338
    %v1428 = vmul.f32 %v1425, 0.35355338
    %v1429 = vadd.f32 %v1427, %v139
    %v1430 = vadd.f32 %v1428, %v140
    %v1431 = vsel %vm228, %v1429, -inf
    %1432 = vmax.xlane.f32.xlu0 %v1431
    %v1433 = vpop.xlane.xlu0 %1432
    %v1434 = vsel %vm228, %v1430, -inf
    %1435 = vmax.xlane.f32.xlu0 %v1434
    %v1436 = vpop.xlane.xlu0 %1435
    %v1437 = vsub.f32 %v1429, %v1433
    %v1438 = vsub.f32 %v1430, %v1436
    %v1439 = vmul.f32 %v1437, 1.442695
    %v1440 = vpow.pop %v1439
    %v1441 = vmul.f32 %v1438, 1.442695
    %v1442 = vpow.pop %v1441
    %v1443 = vsel %vm228, %v1440, 0.0
    %1444 = vadd.xlane.f32.xlu0 %v1443
    %v1445 = vpop.xlane.xlu0 %1444
    %v1446 = vsel %vm228, %v1442, 0.0
    %1447 = vadd.xlane.f32.xlu0 %v1446
    %v1448 = vpop.xlane.xlu0 %1447
    %v1449 = vrcp.pop %v1445
    %v1450 = vmul.f32 %v1445, %v1449
    %v1451 = vsub.f32 1.0, %v1450
    %v1452 = vmul.f32 %v1449, %v1451
    %v1453 = vadd.f32 %v1449, %v1452
    %vm1454 = vweird.f32 %v1445
    %vm1455 = vweird.f32 %v1449
    %vm1456 = vmor %vm1454, %vm1455
    %v1457 = vsel %vm1456, %v1449, %v1453
    %v1458 = vand.u32 2147483647, %v1445
    %vm1459 = vcmp.eq.f32.partialorder %v1458, 8.507059e+37
    %v1460 = vand.u32 %v1445, 2147483648
    %v1461 = vor.u32 1.1754944e-38, %v1460
    %v1462 = vsel %vm1459, %v1461, %v1457
    %v1463 = vmul.f32 %v1440, %v1462
    %v1464 = vrcp.pop %v1448
    %v1465 = vmul.f32 %v1448, %v1464
    %v1466 = vsub.f32 1.0, %v1465
    %v1467 = vmul.f32 %v1464, %v1466
    %v1468 = vadd.f32 %v1464, %v1467
    %vm1469 = vweird.f32 %v1448
    %vm1470 = vweird.f32 %v1464
    %vm1471 = vmor %vm1469, %vm1470
    %v1472 = vsel %vm1471, %v1464, %v1468
    %v1473 = vand.u32 2147483647, %v1448
    %vm1474 = vcmp.eq.f32.partialorder %v1473, 8.507059e+37
    %v1475 = vand.u32 %v1448, 2147483648
    %v1476 = vor.u32 1.1754944e-38, %v1475
    %v1477 = vsel %vm1474, %v1476, %v1472
    %v1478 = vmul.f32 %v1442, %v1477
    %v1479 = vmul.f32 %v1014, %v670
    %v1480 = vmul.f32 %v1016, %v670
    %1483 = vrot.lane.b32.xlu0 %v1479, 64
    %v1484 = vpop.permute.xlu0 %1483
    %1485 = vrot.lane.b32.xlu0 %v1480, 64
    %v1486 = vpop.permute.xlu0 %1485
    %v1490 = vsel %vm228, %v1463, 0
    %v1493 = vsel %vm228, %v1478, 0
    %1495 = vmatpush.msra.mxu0 0.0
    %1496 = vmatpush.msra.mxu0 0.0
    %1497 = vmatpush.msra.mxu0 0.0
    %1498 = vmatpush.msra.mxu0 0.0
    %1499 = vmatpush.msra.mxu0 0.0
    %1500 = vmatpush.msra.mxu0 0.0
    %1501 = vmatpush.msra.mxu0 0.0
    %1502 = vmatpush.msra.mxu0 0.0
    %1503 = vmatpush.msra.mxu0 0.0
    %1504 = vmatpush.msra.mxu0 0.0
    %1505 = vmatpush.msra.mxu0 0.0
    %1506 = vmatpush.msra.mxu0 0.0
    %1507 = vmatpush.msra.mxu0 0.0
    %1508 = vmatpush.msra.mxu0 0.0
    %1509 = vmatpush.msra.mxu0 %v1486
    %1510 = vmatpush.msra.mxu0 %v1484
    %1511 = vmatmul.f32.gmra.mxu0 %v1490
    %v1512 = vpop.f32.mrf.mxu0
    %v1513 = vadd.f32 0.0, %v1512
    %1514 = vmatmul.f32.gmra.mxu0 %v1493
    %v1515 = vpop.f32.mrf.mxu0
    %v1516 = vadd.f32 0.0, %v1515
    %1517 = vdwg.mxu0
    %v1518 = vadd.f32 %v1394, %v1513
    %v1519 = vadd.f32 %v1395, %v1516
    %s1520 = scalar_lea.vmem %s8, 16
    %v1521 = vld [vmem:[%s1520] sm:$0xf]
    %v1522 = vld [vmem:[%s1520 + $0x4] sm:$0xf]
    %v1523 = vld [vmem:[%s1520 + $0x8] sm:$0xf]
    %v1524 = vld [vmem:[%s1520 + $0xc] sm:$0xf]
    %s1525 = scalar_lea.vmem %s9, 1
    %v1526 = vld [vmem:[%s1525] sm:$0x1]
    %v1527 = vpack.c.bf16 %v1519, %v1518
    %v1529 = vperm.slane %v1526, 0
    %v1535 = vunpack.c.l.b16 %v1521
    %v1536 = vunpack.c.l.b16 %v1522
    %v1537 = vunpack.c.l.b16 %v1523
    %v1538 = vunpack.c.l.b16 %v1524
    %v1539 = vpack.c.b16 %v1536, %v1535
    %v1540 = vpack.c.b16 %v1538, %v1537
    %v1544 = vsel %vm77, %v1527, 0
    %1546 = vmatpush.bf16.msra.mxu0 0
    %1547 = vmatpush.bf16.msra.mxu0 0
    %1548 = vmatpush.bf16.msra.mxu0 0
    %1549 = vmatpush.bf16.msra.mxu0 0
    %1550 = vmatpush.bf16.msra.mxu0 0
    %1551 = vmatpush.bf16.msra.mxu0 0
    %1552 = vmatpush.bf16.msra.mxu0 %v1540
    %1553 = vmatpush.bf16.msra.mxu0 %v1539
    %1554 = vmatmul.bf16.gmra.mxu0 %v1544
    %v1555 = vpop.f32.mrf.mxu0
    %v1556 = vadd.f32 %v1529, %v1555
    %v1557 = vpop.f32.mrf.mxu0
    %v1558 = vadd.f32 %v1529, %v1557
    %1559 = vdwg.mxu0
    %v1560 = vadd.f32 %v1556, %v976
    %v1561 = vadd.f32 %v1558, %v977
    %s1562 = scalar_lea.vmem %s10, 1
    %v1563 = vld [vmem:[%s1562] sm:$0x1]
    %s1564 = scalar_lea.vmem %s11, 1
    %v1565 = vld [vmem:[%s1564] sm:$0x1]
    %v1566 = vsel %vm77, %v1560, 0.0
    %1567 = vadd.xlane.f32.xlu0 %v1566
    %v1568 = vpop.xlane.xlu0 %1567
    %v1569 = vsel %vm77, %v1561, 0.0
    %1570 = vadd.xlane.f32.xlu0 %v1569
    %v1571 = vpop.xlane.xlu0 %1570
    %v1572 = vmul.f32 %v1568, %v90
    %v1573 = vmul.f32 %v1571, %v90
    %v1574 = vsub.f32 %v1560, %v1572
    %v1575 = vsub.f32 %v1561, %v1573
    %v1576 = vmul.f32 %v1574, %v1574
    %v1577 = vmul.f32 %v1575, %v1575
    %v1578 = vsel %vm77, %v1576, 0.0
    %1579 = vadd.xlane.f32.xlu0 %v1578
    %v1580 = vpop.xlane.xlu0 %1579
    %v1581 = vsel %vm77, %v1577, 0.0
    %1582 = vadd.xlane.f32.xlu0 %v1581
    %v1583 = vpop.xlane.xlu0 %1582
    %v1584 = vmul.f32 %v1580, %v90
    %v1585 = vmul.f32 %v1583, %v90
    %v1586 = vadd.f32 %v1584, 1e-12
    %v1587 = vadd.f32 %v1585, 1e-12
    %v1588 = vrsqrt.pop %v1586
    %v1589 = vmul.f32 %v1588, %v1586
    %v1590 = vmul.f32 %v1589, %v1588
    %v1591 = vmul.f32 0.5, %v1590
    %v1592 = vsub.f32 1.5, %v1591
    %v1593 = vmul.f32 %v1588, %v1592
    %vm1594 = vweird.f32 %v1586
    %vm1595 = vweird.f32 %v1588
    %vm1596 = vmor %vm1594, %vm1595
    %v1597 = vsel %vm1596, %v1588, %v1593
    %v1598 = vrsqrt.pop %v1587
    %v1599 = vmul.f32 %v1598, %v1587
    %v1600 = vmul.f32 %v1599, %v1598
    %v1601 = vmul.f32 0.5, %v1600
    %v1602 = vsub.f32 1.5, %v1601
    %v1603 = vmul.f32 %v1598, %v1602
    %vm1604 = vweird.f32 %v1587
    %vm1605 = vweird.f32 %v1598
    %vm1606 = vmor %vm1604, %vm1605
    %v1607 = vsel %vm1606, %v1598, %v1603
    %v1608 = vmul.f32 %v1574, %v1597
    %v1609 = vmul.f32 %v1575, %v1607
    %v1611 = vperm.slane %v1563, 0
    %v1613 = vmul.f32 %v1608, %v1611
    %v1614 = vmul.f32 %v1609, %v1611
    %v1616 = vperm.slane %v1565, 0
    %v1618 = vadd.f32 %v1613, %v1616
    %v1619 = vadd.f32 %v1614, %v1616
    %s1620 = scalar_lea.vmem %s12, 16
    %v1621 = vld [vmem:[%s1620] sm:$0xf]
    %v1622 = vld [vmem:[%s1620 + $0x4] sm:$0xf]
    %v1623 = vld [vmem:[%s1620 + $0x8] sm:$0xf]
    %v1624 = vld [vmem:[%s1620 + $0xc] sm:$0xf]
    %s1625 = scalar_lea.vmem %s13, 1
    %v1626 = vld [vmem:[%s1625] sm:$0x1]
    %v1627 = vpack.c.bf16 %v1619, %v1618
    %v1629 = vperm.slane %v1626, 0
    %v1635 = vunpack.c.l.b16 %v1621
    %v1636 = vunpack.c.l.b16 %v1622
    %v1637 = vunpack.c.l.b16 %v1623
    %v1638 = vunpack.c.l.b16 %v1624
    %v1639 = vpack.c.b16 %v1636, %v1635
    %v1640 = vpack.c.b16 %v1638, %v1637
    %v1644 = vsel %vm77, %v1627, 0
    %1646 = vmatpush.bf16.msra.mxu0 0
    %1647 = vmatpush.bf16.msra.mxu0 0
    %1648 = vmatpush.bf16.msra.mxu0 0
    %1649 = vmatpush.bf16.msra.mxu0 0
    %1650 = vmatpush.bf16.msra.mxu0 0
    %1651 = vmatpush.bf16.msra.mxu0 0
    %1652 = vmatpush.bf16.msra.mxu0 %v1640
    %1653 = vmatpush.bf16.msra.mxu0 %v1639
    %1654 = vmatmul.bf16.gmra.mxu0 %v1644
    %v1655 = vpop.f32.mrf.mxu0
    %v1656 = vadd.f32 %v1629, %v1655
    %v1657 = vpop.f32.mrf.mxu0
    %v1658 = vadd.f32 %v1629, %v1657
    %1659 = vdwg.mxu0
    %v1660 = vmul.f32 %v1656, 0.5
    %v1661 = vmul.f32 %v1658, 0.5
    %v1662 = vmul.f32 %v1656, 0.044715
    %v1663 = vmul.f32 %v1658, 0.044715
    %v1664 = vmul.f32 %v1662, %v1656
    %v1665 = vmul.f32 %v1663, %v1658
    %v1666 = vmul.f32 %v1664, %v1656
    %v1667 = vmul.f32 %v1665, %v1658
    %v1668 = vadd.f32 %v1656, %v1666
    %v1669 = vadd.f32 %v1658, %v1667
    %v1670 = vmul.f32 %v1668, 0.7978846
    %v1671 = vmul.f32 %v1669, 0.7978846
    %v1672 = vtanh.pop %v1670
    %v1673 = vtanh.pop %v1671
    %v1674 = vadd.f32 %v1672, 1.0
    %v1675 = vadd.f32 %v1673, 1.0
    %v1676 = vmul.f32 %v1660, %v1674
    %v1677 = vmul.f32 %v1661, %v1675
    %s1678 = scalar_lea.vmem %s14, 32
    %v1679 = vld [vmem:[%s1678] sm:$0xf]
    %v1680 = vld [vmem:[%s1678 + $0x4] sm:$0xf]
    %v1681 = vld [vmem:[%s1678 + $0x8] sm:$0xf]
    %v1682 = vld [vmem:[%s1678 + $0xc] sm:$0xf]
    %v1683 = vld [vmem:[%s1678 + $0x10] sm:$0xf]
    %v1684 = vld [vmem:[%s1678 + $0x14] sm:$0xf]
    %v1685 = vld [vmem:[%s1678 + $0x18] sm:$0xf]
    %v1686 = vld [vmem:[%s1678 + $0x1c] sm:$0xf]
    %s1687 = scalar_lea.vmem %s15, 1
    %v1688 = vld [vmem:[%s1687] sm:$0x1]
    %v1689 = vpack.c.bf16 %v1677, %v1676
    %v1691 = vperm.slane %v1688, 0
    %v1701 = vunpack.c.l.b16 %v1679
    %v1702 = vunpack.c.l.b16 %v1680
    %v1703 = vunpack.c.l.b16 %v1681
    %v1704 = vunpack.c.l.b16 %v1682
    %v1705 = vunpack.c.l.b16 %v1683
    %v1706 = vunpack.c.l.b16 %v1684
    %v1707 = vunpack.c.l.b16 %v1685
    %v1708 = vunpack.c.l.b16 %v1686
    %v1709 = vpack.c.b16 %v1702, %v1701
    %v1710 = vpack.c.b16 %v1704, %v1703
    %v1711 = vpack.c.b16 %v1706, %v1705
    %v1712 = vpack.c.b16 %v1708, %v1707
    %v1718 = vsel %vm902, %v1689, 0
    %1720 = vmatpush.bf16.msra.mxu0 0
    %1721 = vmatpush.bf16.msra.mxu0 0
    %1722 = vmatpush.bf16.msra.mxu0 0
    %1723 = vmatpush.bf16.msra.mxu0 0
    %1724 = vmatpush.bf16.msra.mxu0 %v1712
    %1725 = vmatpush.bf16.msra.mxu0 %v1711
    %1726 = vmatpush.bf16.msra.mxu0 %v1710
    %1727 = vmatpush.bf16.msra.mxu0 %v1709
    %1728 = vmatmul.bf16.gmra.mxu0 %v1718
    %v1729 = vpop.f32.mrf.mxu0
    %v1730 = vadd.f32 %v1691, %v1729
    %v1731 = vpop.f32.mrf.mxu0
    %v1732 = vadd.f32 %v1691, %v1731
    %1733 = vdwg.mxu0
    %v1734 = vadd.f32 %v1730, %v1618
    %v1735 = vadd.f32 %v1732, %v1619
    %s1736 = scalar_lea.vmem %s16, 1
    %v1737 = vld [vmem:[%s1736] sm:$0x1]
    %s1738 = scalar_lea.vmem %s17, 1
    %v1739 = vld [vmem:[%s1738] sm:$0x1]
    %v1740 = vsel %vm77, %v1734, 0.0
    %1741 = vadd.xlane.f32.xlu0 %v1740
    %v1742 = vpop.xlane.xlu0 %1741
    %v1743 = vsel %vm77, %v1735, 0.0
    %1744 = vadd.xlane.f32.xlu0 %v1743
    %v1745 = vpop.xlane.xlu0 %1744
    %v1746 = vmul.f32 %v1742, %v90
    %v1747 = vmul.f32 %v1745, %v90
    %v1748 = vsub.f32 %v1734, %v1746
    %v1749 = vsub.f32 %v1735, %v1747
    %v1750 = vmul.f32 %v1748, %v1748
    %v1751 = vmul.f32 %v1749, %v1749
    %v1752 = vsel %vm77, %v1750, 0.0
    %1753 = vadd.xlane.f32.xlu0 %v1752
    %v1754 = vpop.xlane.xlu0 %1753
    %v1755 = vsel %vm77, %v1751, 0.0
    %1756 = vadd.xlane.f32.xlu0 %v1755
    %v1757 = vpop.xlane.xlu0 %1756
    %v1758 = vmul.f32 %v1754, %v90
    %v1759 = vmul.f32 %v1757, %v90
    %v1760 = vadd.f32 %v1758, 1e-12
    %v1761 = vadd.f32 %v1759, 1e-12
    %v1762 = vrsqrt.pop %v1760
    %v1763 = vmul.f32 %v1762, %v1760
    %v1764 = vmul.f32 %v1763, %v1762
    %v1765 = vmul.f32 0.5, %v1764
    %v1766 = vsub.f32 1.5, %v1765
    %v1767 = vmul.f32 %v1762, %v1766
    %vm1768 = vweird.f32 %v1760
    %vm1769 = vweird.f32 %v1762
    %vm1770 = vmor %vm1768, %vm1769
    %v1771 = vsel %vm1770, %v1762, %v1767
    %v1772 = vrsqrt.pop %v1761
    %v1773 = vmul.f32 %v1772, %v1761
    %v1774 = vmul.f32 %v1773, %v1772
    %v1775 = vmul.f32 0.5, %v1774
    %v1776 = vsub.f32 1.5, %v1775
    %v1777 = vmul.f32 %v1772, %v1776
    %vm1778 = vweird.f32 %v1761
    %vm1779 = vweird.f32 %v1772
    %vm1780 = vmor %vm1778, %vm1779
    %v1781 = vsel %vm1780, %v1772, %v1777
    %v1782 = vmul.f32 %v1748, %v1771
    %v1783 = vmul.f32 %v1749, %v1781
    %v1785 = vperm.slane %v1737, 0
    %v1787 = vmul.f32 %v1782, %v1785
    %v1788 = vmul.f32 %v1783, %v1785
    %v1790 = vperm.slane %v1739, 0
    %v1792 = vadd.f32 %v1787, %v1790
    %v1793 = vadd.f32 %v1788, %v1790
    %v1794 = vld [vmem:[%s3] sm:$0x3]
    %v1796 = vsel %vm228, %v1794, 0
    %1798 = vmatpush.msra.mxu0 0.0
    %1799 = vmatpush.msra.mxu0 0.0
    %1800 = vmatpush.msra.mxu0 0.0
    %1801 = vmatpush.msra.mxu0 0.0
    %1802 = vmatpush.msra.mxu0 0.0
    %1803 = vmatpush.msra.mxu0 0.0
    %1804 = vmatpush.msra.mxu0 0.0
    %1805 = vmatpush.msra.mxu0 0.0
    %1806 = vmatpush.msra.mxu0 0.0
    %1807 = vmatpush.msra.mxu0 0.0
    %1808 = vmatpush.msra.mxu0 0.0
    %1809 = vmatpush.msra.mxu0 0.0
    %1810 = vmatpush.msra.mxu0 0.0
    %1811 = vmatpush.msra.mxu0 0.0
    %1812 = vmatpush.msra.mxu0 %v1793
    %1813 = vmatpush.msra.mxu0 %v1792
    %1814 = vmatmul.f32.gmra.mxu0 %v1796
    %v1815 = vpop.f32.mrf.mxu0
    %v1816 = vadd.f32 0.0, %v1815
    %1817 = vdwg.mxu0
    %v1818 = vld [vmem:[%s18] sm:$0xf]
    %v1819 = vld [vmem:[%s18 + $0x4] sm:$0xf]
    %v1820 = vld [vmem:[%s18 + $0x8] sm:$0xf]
    %v1821 = vld [vmem:[%s18 + $0xc] sm:$0xf]
    %v1822 = vld [vmem:[%s19] sm:$0x1]
    %v1823 = vpack.c.bf16 %v1816, %v1816
    %v1825 = vperm.slane %v1822, 0
    %v1831 = vunpack.c.l.b16 %v1818
    %v1832 = vunpack.c.l.b16 %v1819
    %v1833 = vunpack.c.l.b16 %v1820
    %v1834 = vunpack.c.l.b16 %v1821
    %v1835 = vpack.c.b16 %v1832, %v1831
    %v1836 = vpack.c.b16 %v1834, %v1833
    %v1840 = vsel %vm77, %v1823, 0
    %1842 = vmatpush.bf16.msra.mxu0 0
    %1843 = vmatpush.bf16.msra.mxu0 0
    %1844 = vmatpush.bf16.msra.mxu0 0
    %1845 = vmatpush.bf16.msra.mxu0 0
    %1846 = vmatpush.bf16.msra.mxu0 0
    %1847 = vmatpush.bf16.msra.mxu0 0
    %1848 = vmatpush.bf16.msra.mxu0 %v1836
    %1849 = vmatpush.bf16.msra.mxu0 %v1835
    %1850 = vmatmul.bf16.gmra.mxu0 %v1840
    %v1851 = vpop.f32.mrf.mxu0
    %v1852 = vadd.f32 %v1825, %v1851
    %v1853 = vpop.f32.mrf.mxu0
    %1854 = vdwg.mxu0
    %v1855 = vtanh.pop %v1852
    %v1856 = vld [vmem:[%s20] sm:$0xf]
    %v1857 = vld [vmem:[%s20 + $0x4] sm:$0xf]
    %v1858 = vld [vmem:[%s20 + $0x8] sm:$0xf]
    %v1859 = vld [vmem:[%s20 + $0xc] sm:$0xf]
    %v1860 = vld [vmem:[%s21] sm:$0x1]
    %v1861 = vpack.c.bf16 %v1855, %v1855
    %v1863 = vperm.slane %v1860, 0
    %v1869 = vunpack.c.l.b16 %v1856
    %v1870 = vunpack.c.l.b16 %v1857
    %v1871 = vunpack.c.l.b16 %v1858
    %v1872 = vunpack.c.l.b16 %v1859
    %v1873 = vpack.c.b16 %v1870, %v1869
    %v1874 = vpack.c.b16 %v1872, %v1871
    %v1878 = vsel %vm77, %v1861, 0
    %1880 = vmatpush.bf16.msra.mxu0 0
    %1881 = vmatpush.bf16.msra.mxu0 0
    %1882 = vmatpush.bf16.msra.mxu0 0
    %1883 = vmatpush.bf16.msra.mxu0 0
    %1884 = vmatpush.bf16.msra.mxu0 0
    %1885 = vmatpush.bf16.msra.mxu0 0
    %1886 = vmatpush.bf16.msra.mxu0 %v1874
    %1887 = vmatpush.bf16.msra.mxu0 %v1873
    %1888 = vmatmul.bf16.gmra.mxu0 %v1878
    %v1889 = vpop.f32.mrf.mxu0
    %v1890 = vadd.f32 %v1863, %v1889
    %v1891 = vpop.f32.mrf.mxu0
    %1892 = vdwg.mxu0
    %vm1893 = vcmask 1041408
    %v1894 = vsel %vm1893, %v1890, -inf
    %1895 = vmax.xlane.f32.xlu0 %v1894
    %v1896 = vpop.xlane.xlu0 %1895
    %v1897 = vsub.f32 %v1890, %v1896
    %v1898 = vmul.f32 %v1897, 1.442695
    %v1899 = vpow.pop %v1898
    %v1900 = vsel %vm1893, %v1899, 0.0
    %1901 = vadd.xlane.f32.xlu0 %v1900
    %v1902 = vpop.xlane.xlu0 %1901
    %v1903 = vrcp.pop %v1902
    %v1904 = vmul.f32 %v1902, %v1903
    %v1905 = vsub.f32 1.0, %v1904
    %v1906 = vmul.f32 %v1903, %v1905
    %v1907 = vadd.f32 %v1903, %v1906
    %vm1908 = vweird.f32 %v1902
    %vm1909 = vweird.f32 %v1903
    %vm1910 = vmor %vm1908, %vm1909
    %v1911 = vsel %vm1910, %v1903, %v1907
    %v1912 = vand.u32 2147483647, %v1902
    %vm1913 = vcmp.eq.f32.partialorder %v1912, 8.507059e+37
    %v1914 = vand.u32 %v1902, 2147483648
    %v1915 = vor.u32 1.1754944e-38, %v1914
    %v1916 = vsel %vm1913, %v1915, %v1911
    %v1917 = vmul.f32 %v1899, %v1916
    %1918 = vst [vmem:[#allocation2] sm:$0x3] %v1917
    // Predicated region
    $region90: #{bert_base_uncased_forward.1} parent=1 // pred_check
      _
    $region91: #{bert_base_uncased_forward.1} parent=1 // pred_check_branch
      %1920 = sbr.rel (0) target = $region93
    $region92: #{bert_base_uncased_forward.1} parent=1 // pred_region
      %1922 = vsyncadd [#allocation3], 0
      %s1924 = sshll.u32 [#allocation2], 4
      %s1925 = int_to_ptr.vmem [resolvable:$true] %s1924
      %s1926 = sshll.u32 %s22, 4
      %s1927 = int_to_ptr.hbm [resolvable:$true] %s1926
      %1929 = dma.vmem_to_hbm [thread:$0]  %s1925, 32, %s1927, [#allocation3]
    $region93: #{bert_base_uncased_forward.1} parent=1 // pred_fallthru
      _
    // Predicated region
    $region94: #{bert_base_uncased_forward.1} parent=1 // pred_check
      _
    $region95: #{bert_base_uncased_forward.1} parent=1 // pred_check_branch
      %1931 = sbr.rel (0) target = $region97
    $region96: #{bert_base_uncased_forward.1} parent=1 // pred_region
      %1933 = dma.done [#allocation3], 32
    $region97: #{bert_base_uncased_forward.1} parent=1 // pred_fallthru
      _
    %1934 = vsyncpa [#allocation3], 1

</llo_original>
